<compile_context>
chip_gen: v5e
topology: v5e:2x2
jax: 0.10.0
libtpu: 0.0.40
codegen_flags: <defaults>
</compile_context>

<pallas_src>
import functools

import jax
import jax.numpy as jnp
from jax.experimental import pallas as pl
from jax.experimental.pallas import tpu as pltpu


def bert_output_kernel(x_ref, w_ref, b_ref, res_ref, g_ref, beta_ref, o_ref,
                       *, compute_dtype):
    """Fused: o = LayerNorm(x @ W + b + residual), eps = 1e-12.

    x_ref:   (tm, I) native dtype — streamed per M tile, cast to bf16 in-kernel
    w_ref:   (I,  H) bf16         — VMEM-resident (same block for every grid step)
    b_ref, g_ref, beta_ref: (1, H) f32
    res_ref: (tm, H) native dtype
    o_ref:   (tm, H) output dtype
    """
    # Cast the streamed x tile to the MXU dtype in-kernel (x stays native in HBM).
    xb = x_ref[...].astype(compute_dtype)
    # Single big MXU dot per M tile, f32 accumulation.
    y = jnp.dot(xb, w_ref[...], preferred_element_type=jnp.float32)
    # Bias + residual add (dropout is identity in eval mode).
    y = y + b_ref[...] + res_ref[...].astype(jnp.float32)
    # LayerNorm over the hidden (lane) dim; gamma/mean folded into scale/shift FMAs.
    mean = jnp.mean(y, axis=-1, keepdims=True)
    centered = y - mean
    var = jnp.mean(centered * centered, axis=-1, keepdims=True)
    scale = g_ref[...] * jax.lax.rsqrt(var + 1e-12)     # (tm, H)
    shift = beta_ref[...] - mean * scale                # (tm, H)
    o_ref[...] = (y * scale + shift).astype(o_ref.dtype)


def _pick_tm(M, target):
    """Largest multiple-of-8 divisor of M that is <= target (else M itself)."""
    if M <= target:
        return M
    best = 0
    cand = 8
    while cand <= target:
        if M % cand == 0:
            best = cand
        cand += 8
    return best if best else M


def _vmem_capacity_bytes():
    try:
        info = pltpu.get_tpu_info()
        cap = int(getattr(info, "vmem_capacity_bytes", 0))
        if cap > 0:
            return cap
    except Exception:
        pass
    return 64 * 1024 * 1024   # conservative default (v7x per-TC budget)


def bert_output(hidden_states, input_tensor, weight, bias, gamma, beta,
                *, tm=None, compute_dtype=jnp.bfloat16):
    """hidden_states: [B, S, I], input_tensor: [B, S, H] -> [B, S, H]."""
    B, S, I = hidden_states.shape
    H = input_tensor.shape[-1]
    M = B * S
    out_dtype = hidden_states.dtype

    vmem_cap = _vmem_capacity_bytes()
    # Generation-aware row tile: 512 on 128-MiB VMEM parts (v5e/v6e), 256 on v7x.
    target_tm = tm if tm is not None else (512 if vmem_cap >= 100 * 1024 * 1024 else 256)
    tm = _pick_tm(M, target_tm)
    grid_m = M // tm

    # No dtype conversion on the big streams: x and residual stay native in HBM.
    x2d = hidden_states.reshape(M, I)
    res2d = input_tensor.reshape(M, H)
    # Weight is small and read from HBM exactly once; one-time wrapper cast is fine.
    w = weight.astype(compute_dtype)
    b2d = bias.reshape(1, H).astype(jnp.float32)
    g2d = gamma.reshape(1, H).astype(jnp.float32)
    beta2d = beta.reshape(1, H).astype(jnp.float32)

    x_sz = jnp.dtype(x2d.dtype).itemsize
    res_sz = jnp.dtype(res2d.dtype).itemsize
    out_sz = jnp.dtype(out_dtype).itemsize
    w_sz = jnp.dtype(compute_dtype).itemsize

    kernel = functools.partial(bert_output_kernel, compute_dtype=compute_dtype)

    cost = pl.CostEstimate(
        flops=2 * M * I * H,
        transcendentals=M,   # one rsqrt per row
        bytes_accessed=(M * I * x_sz + I * H * w_sz + M * H * res_sz
                        + M * H * out_sz + 3 * H * 4),
    )

    def run(single_buffer_consts):
        wbufs = 1 if single_buffer_consts else 2
        need = (wbufs * I * H * w_sz                 # resident weight buffer(s)
                + 2 * tm * I * x_sz                  # x tiles (double-buffered, native dtype)
                + 2 * tm * H * res_sz                # residual tiles
                + 2 * tm * H * out_sz                # output tiles
                + 4 * tm * H * 4                     # f32 epilogue temporaries
                + wbufs * 3 * H * 4)                 # bias / gamma / beta
        vmem_limit = int(min(max(need * 3 // 2, 32 * 1024 * 1024),
                             int(vmem_cap * 0.75)))

        if single_buffer_consts:
            def const_spec(shape):
                return pl.BlockSpec(shape, lambda i: (0, 0),
                                    pipeline_mode=pl.Buffered(1))
        else:
            def const_spec(shape):
                return pl.BlockSpec(shape, lambda i: (0, 0))

        return pl.pallas_call(
            kernel,
            out_shape=jax.ShapeDtypeStruct((M, H), out_dtype),
            grid_spec=pltpu.PrefetchScalarGridSpec(
                num_scalar_prefetch=0,
                grid=(grid_m,),
                in_specs=[
                    pl.BlockSpec((tm, I), lambda i: (i, 0)),   # x tile (streamed)
                    const_spec((I, H)),                        # W (VMEM-resident)
                    const_spec((1, H)),                        # bias
                    pl.BlockSpec((tm, H), lambda i: (i, 0)),   # residual tile
                    const_spec((1, H)),                        # gamma
                    const_spec((1, H)),                        # beta
                ],
                out_specs=pl.BlockSpec((tm, H), lambda i: (i, 0)),
            ),
            compiler_params=pltpu.CompilerParams(
                dimension_semantics=("parallel",),
                vmem_limit_bytes=vmem_limit),
            cost_estimate=cost,
        )(x2d, w, b2d, res2d, g2d, beta2d)

    try:
        out2d = run(single_buffer_consts=True)
    except Exception:
        # Fallback if this Pallas build rejects pipeline_mode=pl.Buffered(1).
        out2d = run(single_buffer_consts=False)

    return out2d.reshape(B, S, H)


def reference(hidden_states, input_tensor, weight, bias, gamma, beta,
              compute_dtype=jnp.bfloat16):
    # Matmul-operand dtype matches the kernel (bf16 operands, f32 accumulate).
    xb = hidden_states.astype(compute_dtype)
    wb = weight.astype(compute_dtype)
    y = jnp.einsum("bsi,ih->bsh", xb, wb,
                   preferred_element_type=jnp.float32) + bias
    y = y + input_tensor
    mean = jnp.mean(y, axis=-1, keepdims=True)
    var = jnp.mean((y - mean) ** 2, axis=-1, keepdims=True)
    out = (y - mean) * jax.lax.rsqrt(var + 1e-12) * gamma + beta
    return out.astype(hidden_states.dtype)


if __name__ == "__main__":
    # Small shapes consistent with BertOutput(intermediate_size, hidden_size)
    B, S = 2, 8
    intermediate_size = 512
    hidden_size = 256

    key = jax.random.PRNGKey(0)
    k1, k2, k3, k4 = jax.random.split(key, 4)

    hidden_states = jax.random.normal(k1, (B, S, intermediate_size), jnp.float32)
    input_tensor = jax.random.normal(k2, (B, S, hidden_size), jnp.float32)

    # Deterministic parameter init (nn.Linear-style uniform, LN gamma=1/beta=0)
    bound = 1.0 / (intermediate_size ** 0.5)
    weight = jax.random.uniform(k3, (intermediate_size, hidden_size),
                                jnp.float32, -bound, bound)
    bias = jax.random.uniform(k4, (hidden_size,), jnp.float32, -bound, bound)
    gamma = jnp.ones((hidden_size,), jnp.float32)
    beta = jnp.zeros((hidden_size,), jnp.float32)

    out = bert_output(hidden_states, input_tensor, weight, bias, gamma, beta)
    out = jax.block_until_ready(out)

    ref = reference(hidden_states, input_tensor, weight, bias, gamma, beta)
    assert out.shape == (B, S, hidden_size)
    assert jnp.allclose(out, ref, atol=2e-3, rtol=2e-3), "mismatch vs reference"

    print("KERNEL_OK")
</pallas_src>

<mosaic_0001>
module attributes {stable_mosaic.version = 11 : i64} {
  func.func @bert_output_kernel(%arg0: i32, %arg1: memref<16x512xf32, #tpu.memory_space<vmem>>, %arg2: memref<512x256xbf16, #tpu.memory_space<vmem>>, %arg3: memref<1x256xf32, #tpu.memory_space<vmem>>, %arg4: memref<16x256xf32, #tpu.memory_space<vmem>>, %arg5: memref<1x256xf32, #tpu.memory_space<vmem>>, %arg6: memref<1x256xf32, #tpu.memory_space<vmem>>, %arg7: memref<16x256xf32, #tpu.memory_space<vmem>>) attributes {dimension_semantics = [#tpu.dimension_semantics<parallel>], iteration_bounds = array<i64: 1>, scalar_prefetch = 0 : i64, scratch_operands = 0 : i64, tpu.core_type = #tpu.core_type<tc>, window_params = [{transform_indices = @transform_0, window_bounds = array<i64: 16, 512>}, {pipeline_mode = #tpu.pipeline_mode<synchronous>, transform_indices = @transform_1, window_bounds = array<i64: 512, 256>}, {pipeline_mode = #tpu.pipeline_mode<synchronous>, transform_indices = @transform_2, window_bounds = array<i64: 1, 256>}, {transform_indices = @transform_3, window_bounds = array<i64: 16, 256>}, {pipeline_mode = #tpu.pipeline_mode<synchronous>, transform_indices = @transform_4, window_bounds = array<i64: 1, 256>}, {pipeline_mode = #tpu.pipeline_mode<synchronous>, transform_indices = @transform_5, window_bounds = array<i64: 1, 256>}, {transform_indices = @transform_6, window_bounds = array<i64: 16, 256>}]} {
    %c0 = arith.constant 0 : index
    %c0_0 = arith.constant 0 : index
    %0 = vector.load %arg1[%c0, %c0_0] : memref<16x512xf32, #tpu.memory_space<vmem>>, vector<16x512xf32>
    %1 = arith.truncf %0 : vector<16x512xf32> to vector<16x512xbf16>
    %c0_1 = arith.constant 0 : index
    %c0_2 = arith.constant 0 : index
    %2 = vector.load %arg2[%c0_1, %c0_2] : memref<512x256xbf16, #tpu.memory_space<vmem>>, vector<512x256xbf16>
    %cst = arith.constant dense<0.000000e+00> : vector<16x256xf32>
    %3 = tpu.matmul %1, %2, %cst {dimension_numbers = #tpu.dot_dimension_numbers<[1], [0], [0], [1], [0, 0, 1, 1], [], []>} : vector<16x512xbf16>, vector<512x256xbf16>, vector<16x256xf32> -> vector<16x256xf32>
    %c0_3 = arith.constant 0 : index
    %c0_4 = arith.constant 0 : index
    %4 = vector.load %arg3[%c0_3, %c0_4] : memref<1x256xf32, #tpu.memory_space<vmem>>, vector<1x256xf32>
    %5 = vector.broadcast %4 : vector<1x256xf32> to vector<16x256xf32>
    %6 = arith.addf %3, %5 : vector<16x256xf32>
    %c0_5 = arith.constant 0 : index
    %c0_6 = arith.constant 0 : index
    %7 = vector.load %arg4[%c0_5, %c0_6] : memref<16x256xf32, #tpu.memory_space<vmem>>, vector<16x256xf32>
    %8 = arith.addf %6, %7 : vector<16x256xf32>
    %cst_7 = arith.constant dense<0.000000e+00> : vector<16xf32>
    %9 = vector.multi_reduction <add>, %8, %cst_7 [1] : vector<16x256xf32> to vector<16xf32>
    %10 = vector.shape_cast %9 : vector<16xf32> to vector<16x1xf32>
    %cst_8 = arith.constant 2.560000e+02 : f32
    %11 = vector.broadcast %cst_8 : f32 to vector<16x1xf32>
    %12 = arith.divf %10, %11 : vector<16x1xf32>
    %13 = vector.broadcast %12 : vector<16x1xf32> to vector<16x256xf32>
    %14 = arith.subf %8, %13 : vector<16x256xf32>
    %15 = arith.mulf %14, %14 : vector<16x256xf32>
    %cst_9 = arith.constant dense<0.000000e+00> : vector<16xf32>
    %16 = vector.multi_reduction <add>, %15, %cst_9 [1] : vector<16x256xf32> to vector<16xf32>
    %17 = vector.shape_cast %16 : vector<16xf32> to vector<16x1xf32>
    %cst_10 = arith.constant 2.560000e+02 : f32
    %18 = vector.broadcast %cst_10 : f32 to vector<16x1xf32>
    %19 = arith.divf %17, %18 : vector<16x1xf32>
    %c0_11 = arith.constant 0 : index
    %c0_12 = arith.constant 0 : index
    %20 = vector.load %arg5[%c0_11, %c0_12] : memref<1x256xf32, #tpu.memory_space<vmem>>, vector<1x256xf32>
    %cst_13 = arith.constant 9.99999996E-13 : f32
    %21 = vector.broadcast %cst_13 : f32 to vector<16x1xf32>
    %22 = arith.addf %19, %21 : vector<16x1xf32>
    %23 = math.rsqrt %22 : vector<16x1xf32>
    %24 = vector.broadcast %20 : vector<1x256xf32> to vector<16x256xf32>
    %25 = vector.broadcast %23 : vector<16x1xf32> to vector<16x256xf32>
    %26 = arith.mulf %24, %25 : vector<16x256xf32>
    %c0_14 = arith.constant 0 : index
    %c0_15 = arith.constant 0 : index
    %27 = vector.load %arg6[%c0_14, %c0_15] : memref<1x256xf32, #tpu.memory_space<vmem>>, vector<1x256xf32>
    %28 = vector.broadcast %12 : vector<16x1xf32> to vector<16x256xf32>
    %29 = arith.mulf %28, %26 : vector<16x256xf32>
    %30 = vector.broadcast %27 : vector<1x256xf32> to vector<16x256xf32>
    %31 = arith.subf %30, %29 : vector<16x256xf32>
    %32 = arith.mulf %8, %26 : vector<16x256xf32>
    %33 = arith.addf %32, %31 : vector<16x256xf32>
    %c0_16 = arith.constant 0 : index
    %c0_17 = arith.constant 0 : index
    %34 = vector.load %arg7[%c0_16, %c0_17] : memref<16x256xf32, #tpu.memory_space<vmem>>, vector<16x256xf32>
    tpu.vector_store %arg7[%c0_16, %c0_17], %33 {strides = array<i32>} : memref<16x256xf32, #tpu.memory_space<vmem>>, vector<16x256xf32>,
    return
  }
  func.func @transform_0(%arg0: i32) -> (i32, i32) {
    %c0_i32 = arith.constant 0 : i32
    %c0_i32_0 = arith.constant 0 : i32
    return %arg0, %c0_i32 : i32, i32
  }
  func.func @transform_1(%arg0: i32) -> (i32, i32) {
    %c0_i32 = arith.constant 0 : i32
    %c0_i32_0 = arith.constant 0 : i32
    %c0_i32_1 = arith.constant 0 : i32
    return %c0_i32, %c0_i32_0 : i32, i32
  }
  func.func @transform_2(%arg0: i32) -> (i32, i32) {
    %c0_i32 = arith.constant 0 : i32
    %c0_i32_0 = arith.constant 0 : i32
    %c0_i32_1 = arith.constant 0 : i32
    return %c0_i32, %c0_i32_0 : i32, i32
  }
  func.func @transform_3(%arg0: i32) -> (i32, i32) {
    %c0_i32 = arith.constant 0 : i32
    %c0_i32_0 = arith.constant 0 : i32
    return %arg0, %c0_i32 : i32, i32
  }
  func.func @transform_4(%arg0: i32) -> (i32, i32) {
    %c0_i32 = arith.constant 0 : i32
    %c0_i32_0 = arith.constant 0 : i32
    %c0_i32_1 = arith.constant 0 : i32
    return %c0_i32, %c0_i32_0 : i32, i32
  }
  func.func @transform_5(%arg0: i32) -> (i32, i32) {
    %c0_i32 = arith.constant 0 : i32
    %c0_i32_0 = arith.constant 0 : i32
    %c0_i32_1 = arith.constant 0 : i32
    return %c0_i32, %c0_i32_0 : i32, i32
  }
  func.func @transform_6(%arg0: i32) -> (i32, i32) {
    %c0_i32 = arith.constant 0 : i32
    %c0_i32_0 = arith.constant 0 : i32
    return %arg0, %c0_i32 : i32, i32
  }
}

module attributes {stable_mosaic.version = 11 : i64} {
  func.func @bert_output_kernel(%arg0: i32, %arg1: memref<16x512xf32, #tpu.memory_space<vmem>>, %arg2: memref<512x256xbf16, #tpu.memory_space<vmem>>, %arg3: memref<1x256xf32, #tpu.memory_space<vmem>>, %arg4: memref<16x256xf32, #tpu.memory_space<vmem>>, %arg5: memref<1x256xf32, #tpu.memory_space<vmem>>, %arg6: memref<1x256xf32, #tpu.memory_space<vmem>>, %arg7: memref<16x256xf32, #tpu.memory_space<vmem>>) attributes {dimension_semantics = [#tpu.dimension_semantics<parallel>], iteration_bounds = array<i64: 1>, scalar_prefetch = 0 : i64, scratch_operands = 0 : i64, tpu.core_type = #tpu.core_type<tc>, window_params = [{transform_indices = @transform_0, window_bounds = array<i64: 16, 512>}, {pipeline_mode = #tpu.pipeline_mode<synchronous>, transform_indices = @transform_1, window_bounds = array<i64: 512, 256>}, {pipeline_mode = #tpu.pipeline_mode<synchronous>, transform_indices = @transform_2, window_bounds = array<i64: 1, 256>}, {transform_indices = @transform_3, window_bounds = array<i64: 16, 256>}, {pipeline_mode = #tpu.pipeline_mode<synchronous>, transform_indices = @transform_4, window_bounds = array<i64: 1, 256>}, {pipeline_mode = #tpu.pipeline_mode<synchronous>, transform_indices = @transform_5, window_bounds = array<i64: 1, 256>}, {transform_indices = @transform_6, window_bounds = array<i64: 16, 256>}]} {
    %c0 = arith.constant 0 : index
    %c0_0 = arith.constant 0 : index
    %0 = vector.load %arg1[%c0, %c0_0] : memref<16x512xf32, #tpu.memory_space<vmem>>, vector<16x512xf32>
    %1 = arith.truncf %0 : vector<16x512xf32> to vector<16x512xbf16>
    %c0_1 = arith.constant 0 : index
    %c0_2 = arith.constant 0 : index
    %2 = vector.load %arg2[%c0_1, %c0_2] : memref<512x256xbf16, #tpu.memory_space<vmem>>, vector<512x256xbf16>
    %cst = arith.constant dense<0.000000e+00> : vector<16x256xf32>
    %3 = tpu.matmul %1, %2, %cst {dimension_numbers = #tpu.dot_dimension_numbers<[1], [0], [0], [1], [0, 0, 1, 1], [], []>} : vector<16x512xbf16>, vector<512x256xbf16>, vector<16x256xf32> -> vector<16x256xf32>
    %c0_3 = arith.constant 0 : index
    %c0_4 = arith.constant 0 : index
    %4 = vector.load %arg3[%c0_3, %c0_4] : memref<1x256xf32, #tpu.memory_space<vmem>>, vector<1x256xf32>
    %5 = vector.broadcast %4 : vector<1x256xf32> to vector<16x256xf32>
    %6 = arith.addf %3, %5 : vector<16x256xf32>
    %c0_5 = arith.constant 0 : index
    %c0_6 = arith.constant 0 : index
    %7 = vector.load %arg4[%c0_5, %c0_6] : memref<16x256xf32, #tpu.memory_space<vmem>>, vector<16x256xf32>
    %8 = arith.addf %6, %7 : vector<16x256xf32>
    %cst_7 = arith.constant dense<0.000000e+00> : vector<16xf32>
    %9 = vector.multi_reduction <add>, %8, %cst_7 [1] : vector<16x256xf32> to vector<16xf32>
    %10 = vector.shape_cast %9 : vector<16xf32> to vector<16x1xf32>
    %cst_8 = arith.constant 2.560000e+02 : f32
    %11 = vector.broadcast %cst_8 : f32 to vector<16x1xf32>
    %12 = arith.divf %10, %11 : vector<16x1xf32>
    %13 = vector.broadcast %12 : vector<16x1xf32> to vector<16x256xf32>
    %14 = arith.subf %8, %13 : vector<16x256xf32>
    %15 = arith.mulf %14, %14 : vector<16x256xf32>
    %cst_9 = arith.constant dense<0.000000e+00> : vector<16xf32>
    %16 = vector.multi_reduction <add>, %15, %cst_9 [1] : vector<16x256xf32> to vector<16xf32>
    %17 = vector.shape_cast %16 : vector<16xf32> to vector<16x1xf32>
    %cst_10 = arith.constant 2.560000e+02 : f32
    %18 = vector.broadcast %cst_10 : f32 to vector<16x1xf32>
    %19 = arith.divf %17, %18 : vector<16x1xf32>
    %c0_11 = arith.constant 0 : index
    %c0_12 = arith.constant 0 : index
    %20 = vector.load %arg5[%c0_11, %c0_12] : memref<1x256xf32, #tpu.memory_space<vmem>>, vector<1x256xf32>
    %cst_13 = arith.constant 9.99999996E-13 : f32
    %21 = vector.broadcast %cst_13 : f32 to vector<16x1xf32>
    %22 = arith.addf %19, %21 : vector<16x1xf32>
    %23 = math.rsqrt %22 : vector<16x1xf32>
    %24 = vector.broadcast %20 : vector<1x256xf32> to vector<16x256xf32>
    %25 = vector.broadcast %23 : vector<16x1xf32> to vector<16x256xf32>
    %26 = arith.mulf %24, %25 : vector<16x256xf32>
    %c0_14 = arith.constant 0 : index
    %c0_15 = arith.constant 0 : index
    %27 = vector.load %arg6[%c0_14, %c0_15] : memref<1x256xf32, #tpu.memory_space<vmem>>, vector<1x256xf32>
    %28 = vector.broadcast %12 : vector<16x1xf32> to vector<16x256xf32>
    %29 = arith.mulf %28, %26 : vector<16x256xf32>
    %30 = vector.broadcast %27 : vector<1x256xf32> to vector<16x256xf32>
    %31 = arith.subf %30, %29 : vector<16x256xf32>
    %32 = arith.mulf %8, %26 : vector<16x256xf32>
    %33 = arith.addf %32, %31 : vector<16x256xf32>
    %c0_16 = arith.constant 0 : index
    %c0_17 = arith.constant 0 : index
    %34 = vector.load %arg7[%c0_16, %c0_17] : memref<16x256xf32, #tpu.memory_space<vmem>>, vector<16x256xf32>
    tpu.vector_store %arg7[%c0_16, %c0_17], %33 {strides = array<i32>} : memref<16x256xf32, #tpu.memory_space<vmem>>, vector<16x256xf32>,
    return
  }
  func.func @transform_0(%arg0: i32) -> (i32, i32) {
    %c0_i32 = arith.constant 0 : i32
    %c0_i32_0 = arith.constant 0 : i32
    return %arg0, %c0_i32 : i32, i32
  }
  func.func @transform_1(%arg0: i32) -> (i32, i32) {
    %c0_i32 = arith.constant 0 : i32
    %c0_i32_0 = arith.constant 0 : i32
    %c0_i32_1 = arith.constant 0 : i32
    return %c0_i32, %c0_i32_0 : i32, i32
  }
  func.func @transform_2(%arg0: i32) -> (i32, i32) {
    %c0_i32 = arith.constant 0 : i32
    %c0_i32_0 = arith.constant 0 : i32
    %c0_i32_1 = arith.constant 0 : i32
    return %c0_i32, %c0_i32_0 : i32, i32
  }
  func.func @transform_3(%arg0: i32) -> (i32, i32) {
    %c0_i32 = arith.constant 0 : i32
    %c0_i32_0 = arith.constant 0 : i32
    return %arg0, %c0_i32 : i32, i32
  }
  func.func @transform_4(%arg0: i32) -> (i32, i32) {
    %c0_i32 = arith.constant 0 : i32
    %c0_i32_0 = arith.constant 0 : i32
    %c0_i32_1 = arith.constant 0 : i32
    return %c0_i32, %c0_i32_0 : i32, i32
  }
  func.func @transform_5(%arg0: i32) -> (i32, i32) {
    %c0_i32 = arith.constant 0 : i32
    %c0_i32_0 = arith.constant 0 : i32
    %c0_i32_1 = arith.constant 0 : i32
    return %c0_i32, %c0_i32_0 : i32, i32
  }
  func.func @transform_6(%arg0: i32) -> (i32, i32) {
    %c0_i32 = arith.constant 0 : i32
    %c0_i32_0 = arith.constant 0 : i32
    return %arg0, %c0_i32 : i32, i32
  }
}

</mosaic_0001>

<llo_original>
// kernel: tpu_custom_call.1
$region0: #{tpu_custom_call.1}
  #allocation0 [shape = 'u32[]', space=smem, size = 0x4, offset = 0x4, fixed_abs, tag = 'smem constant byte address 0x4 - core index']
  #allocation1 [shape = 'u32[72,128]{1,0:T(1,128)}', space=vmem, size = 0x9000, scoped, tag = 'internal scratch']
  %s0 = inlined_call_operand.hbm [shape: f32[16,512], index: 0, kind: input, shape index: {}]
  %s1 = inlined_call_operand.hbm [shape: bf16[512,256], index: 1, kind: input, shape index: {}]
  %s2 = inlined_call_operand.hbm [shape: f32[1,256], index: 2, kind: input, shape index: {}]
  %s3 = inlined_call_operand.hbm [shape: f32[16,256], index: 3, kind: input, shape index: {}]
  %s4 = inlined_call_operand.vmem [shape: f32[1,256], index: 4, kind: input, shape index: {}]
  %s5 = inlined_call_operand.vmem [shape: f32[1,256], index: 5, kind: input, shape index: {}]
  %s6 = inlined_call_operand.hbm [shape: f32[16,256], index: 6, kind: output, shape index: {}]
  %s7 = sld [smem:[#allocation0]]
  $region50: #{tpu_custom_call.1} parent=0
    _
  %s9 = ssub.s32 1, %s7
  %s10 = scalar_select 0, %s9, %s7
  $region1: #{tpu_custom_call.1} parent=0
    #allocation2 [shape = 'u8[32768]{0}', space=vmem, size = 0x8000, scoped, tag = 'input window, operand 0, single buffered']
    #allocation3 [shape = 's32[1]{0}', space=sflag, size = 0x4, scoped, tag = 'scoped memory for tpu_custom_call.1']
    #allocation4 [shape = 's32[1]{0}', space=sflag, size = 0x4, scoped, tag = 'scoped memory for tpu_custom_call.1']
    #allocation5 [shape = 'u8[262144]{0}', space=vmem, size = 0x40000, scoped, tag = 'input window, operand 1, single buffered']
    #allocation6 [shape = 's32[1]{0}', space=sflag, size = 0x4, scoped, tag = 'scoped memory for tpu_custom_call.1']
    #allocation7 [shape = 'u8[1024]{0}', space=vmem, size = 0x400, scoped, tag = 'input window, operand 2, single buffered']
    #allocation8 [shape = 'u8[16384]{0}', space=vmem, size = 0x4000, scoped, tag = 'input window, operand 3, single buffered']
    #allocation9 [shape = 's32[1]{0}', space=sflag, size = 0x4, scoped, tag = 'scoped memory for tpu_custom_call.1']
    #allocation10 [shape = 'u8[16384]{0}', space=vmem, size = 0x4000, scoped, tag = 'output window, operand 0, single buffered']
    %11 = vsyncpa [#allocation3], 0
    %12 = vsyncpa [#allocation6], 0
    %13 = vsyncpa [#allocation9], 0
    %14 = vsyncpa [#allocation4], 0
    // Predicated region
    $region2: #{tpu_custom_call.1} parent=1 // pred_check
      _
    $region3: #{tpu_custom_call.1} parent=1 // pred_check_branch
      %16 = sbr.rel (0) target = $region5
    $region4: #{tpu_custom_call.1} parent=1 // pred_region
      %18 = vsyncadd [#allocation3], 0
      %s19 = sshll.u32 %s0, 4
      %s20 = int_to_ptr.hbm [resolvable:$true] %s19
      %s21 = sshll.u32 [#allocation2], 4
      %s22 = int_to_ptr.vmem [resolvable:$true] %s21
      %27 = dma.hbm_to_vmem [thread:$0]  %s20, 1024, %s22, [#allocation3], 512, 512, 32
    $region5: #{tpu_custom_call.1} parent=1 // pred_fallthru
      _
    // Predicated region
    $region6: #{tpu_custom_call.1} parent=1 // pred_check
      _
    $region7: #{tpu_custom_call.1} parent=1 // pred_check_branch
      %29 = sbr.rel (0) target = $region9
    $region8: #{tpu_custom_call.1} parent=1 // pred_region
      %31 = vsyncadd [#allocation6], 0
      %s32 = sshll.u32 %s1, 4
      %s33 = int_to_ptr.hbm [resolvable:$true] %s32
      %s34 = sshll.u32 [#allocation5], 4
      %s35 = int_to_ptr.vmem [resolvable:$true] %s34
      %40 = dma.hbm_to_vmem [thread:$0]  %s33, 8192, %s35, [#allocation6], 128, 128, 8
    $region9: #{tpu_custom_call.1} parent=1 // pred_fallthru
      _
    // Predicated region
    $region10: #{tpu_custom_call.1} parent=1 // pred_check
      _
    $region11: #{tpu_custom_call.1} parent=1 // pred_check_branch
      %42 = sbr.rel (0) target = $region13
    $region12: #{tpu_custom_call.1} parent=1 // pred_region
      %44 = vsyncadd [#allocation6], 0
      %s46 = sshll.u32 %s2, 4
      %s47 = int_to_ptr.hbm [resolvable:$true] %s46
      %s48 = sshll.u32 [#allocation7], 4
      %s49 = int_to_ptr.vmem [resolvable:$true] %s48
      %51 = dma.hbm_to_vmem [thread:$0]  %s47, 32, %s49, [#allocation6]
    $region13: #{tpu_custom_call.1} parent=1 // pred_fallthru
      _
    // Predicated region
    $region14: #{tpu_custom_call.1} parent=1 // pred_check
      _
    $region15: #{tpu_custom_call.1} parent=1 // pred_check_branch
      %53 = sbr.rel (0) target = $region17
    $region16: #{tpu_custom_call.1} parent=1 // pred_region
      %55 = vsyncadd [#allocation9], 0
      %s56 = sshll.u32 %s3, 4
      %s57 = int_to_ptr.hbm [resolvable:$true] %s56
      %s58 = sshll.u32 [#allocation8], 4
      %s59 = int_to_ptr.vmem [resolvable:$true] %s58
      %64 = dma.hbm_to_vmem [thread:$0]  %s57, 512, %s59, [#allocation9], 256, 256, 16
    $region17: #{tpu_custom_call.1} parent=1 // pred_fallthru
      _
    // Predicated region
    $region18: #{tpu_custom_call.1} parent=1 // pred_check
      _
    $region19: #{tpu_custom_call.1} parent=1 // pred_check_branch
      %66 = sbr.rel (0) target = $region21
    $region20: #{tpu_custom_call.1} parent=1 // pred_region
      _
    $region21: #{tpu_custom_call.1} parent=1 // pred_fallthru
      _
    // Predicated region
    $region22: #{tpu_custom_call.1} parent=1 // pred_check
      _
    $region23: #{tpu_custom_call.1} parent=1 // pred_check_branch
      %68 = sbr.rel (0) target = $region25
    $region24: #{tpu_custom_call.1} parent=1 // pred_region
      _
    $region25: #{tpu_custom_call.1} parent=1 // pred_fallthru
      _
    // Predicated region
    $region26: #{tpu_custom_call.1} parent=1 // pred_check
      _
    $region27: #{tpu_custom_call.1} parent=1 // pred_check_branch
      %70 = sbr.rel (0) target = $region29
    $region28: #{tpu_custom_call.1} parent=1 // pred_region
      %72 = dma.done [#allocation3], 1024
    $region29: #{tpu_custom_call.1} parent=1 // pred_fallthru
      _
    // Predicated region
    $region30: #{tpu_custom_call.1} parent=1 // pred_check
      _
    $region31: #{tpu_custom_call.1} parent=1 // pred_check_branch
      %74 = sbr.rel (0) target = $region33
    $region32: #{tpu_custom_call.1} parent=1 // pred_region
      %76 = dma.done [#allocation6], 8192
    $region33: #{tpu_custom_call.1} parent=1 // pred_fallthru
      _
    // Predicated region
    $region34: #{tpu_custom_call.1} parent=1 // pred_check
      _
    $region35: #{tpu_custom_call.1} parent=1 // pred_check_branch
      %78 = sbr.rel (0) target = $region37
    $region36: #{tpu_custom_call.1} parent=1 // pred_region
      %80 = dma.done [#allocation6], 32
    $region37: #{tpu_custom_call.1} parent=1 // pred_fallthru
      _
    // Predicated region
    $region38: #{tpu_custom_call.1} parent=1 // pred_check
      _
    $region39: #{tpu_custom_call.1} parent=1 // pred_check_branch
      %82 = sbr.rel (0) target = $region41
    $region40: #{tpu_custom_call.1} parent=1 // pred_region
      %84 = dma.done [#allocation9], 512
    $region41: #{tpu_custom_call.1} parent=1 // pred_fallthru
      _
    %v85 = vld [vmem:[#allocation2] sm:$0xff]
    %v86 = vld [vmem:[#allocation2 + $0x8] sm:$0xff]
    %v87 = vld [vmem:[#allocation2 + $0x10] sm:$0xff]
    %v88 = vld [vmem:[#allocation2 + $0x18] sm:$0xff]
    %v89 = vld [vmem:[#allocation2 + $0x20] sm:$0xff]
    %v90 = vld [vmem:[#allocation2 + $0x28] sm:$0xff]
    %v91 = vld [vmem:[#allocation2 + $0x30] sm:$0xff]
    %v92 = vld [vmem:[#allocation2 + $0x38] sm:$0xff]
    %v93 = vpack.c.bf16 %v89, %v85
    %v94 = vpack.c.bf16 %v90, %v86
    %v95 = vpack.c.bf16 %v91, %v87
    %v96 = vpack.c.bf16 %v92, %v88
    %v97 = vld [vmem:[#allocation5] sm:$0xff]
    %v98 = vld [vmem:[#allocation5 + $0x8] sm:$0xff]
    %v99 = vld [vmem:[#allocation5 + $0x10] sm:$0xff]
    %v100 = vld [vmem:[#allocation5 + $0x18] sm:$0xff]
    %v101 = vld [vmem:[#allocation5 + $0x20] sm:$0xff]
    %v102 = vld [vmem:[#allocation5 + $0x28] sm:$0xff]
    %v103 = vld [vmem:[#allocation5 + $0x30] sm:$0xff]
    %v104 = vld [vmem:[#allocation5 + $0x38] sm:$0xff]
    %v105 = vld [vmem:[#allocation5 + $0x40] sm:$0xff]
    %v106 = vld [vmem:[#allocation5 + $0x48] sm:$0xff]
    %v107 = vld [vmem:[#allocation5 + $0x50] sm:$0xff]
    %v108 = vld [vmem:[#allocation5 + $0x58] sm:$0xff]
    %v109 = vld [vmem:[#allocation5 + $0x60] sm:$0xff]
    %v110 = vld [vmem:[#allocation5 + $0x68] sm:$0xff]
    %v111 = vld [vmem:[#allocation5 + $0x70] sm:$0xff]
    %v112 = vld [vmem:[#allocation5 + $0x78] sm:$0xff]
    %v113 = vld [vmem:[#allocation5 + $0x80] sm:$0xff]
    %v114 = vld [vmem:[#allocation5 + $0x88] sm:$0xff]
    %v115 = vld [vmem:[#allocation5 + $0x90] sm:$0xff]
    %v116 = vld [vmem:[#allocation5 + $0x98] sm:$0xff]
    %v117 = vld [vmem:[#allocation5 + $0xa0] sm:$0xff]
    %v118 = vld [vmem:[#allocation5 + $0xa8] sm:$0xff]
    %v119 = vld [vmem:[#allocation5 + $0xb0] sm:$0xff]
    %v120 = vld [vmem:[#allocation5 + $0xb8] sm:$0xff]
    %v121 = vld [vmem:[#allocation5 + $0xc0] sm:$0xff]
    %v122 = vld [vmem:[#allocation5 + $0xc8] sm:$0xff]
    %v123 = vld [vmem:[#allocation5 + $0xd0] sm:$0xff]
    %v124 = vld [vmem:[#allocation5 + $0xd8] sm:$0xff]
    %v125 = vld [vmem:[#allocation5 + $0xe0] sm:$0xff]
    %v126 = vld [vmem:[#allocation5 + $0xe8] sm:$0xff]
    %v127 = vld [vmem:[#allocation5 + $0xf0] sm:$0xff]
    %v128 = vld [vmem:[#allocation5 + $0xf8] sm:$0xff]
    %v129 = vld [vmem:[#allocation5 + $0x100] sm:$0xff]
    %v130 = vld [vmem:[#allocation5 + $0x108] sm:$0xff]
    %v131 = vld [vmem:[#allocation5 + $0x110] sm:$0xff]
    %v132 = vld [vmem:[#allocation5 + $0x118] sm:$0xff]
    %v133 = vld [vmem:[#allocation5 + $0x120] sm:$0xff]
    %v134 = vld [vmem:[#allocation5 + $0x128] sm:$0xff]
    %v135 = vld [vmem:[#allocation5 + $0x130] sm:$0xff]
    %v136 = vld [vmem:[#allocation5 + $0x138] sm:$0xff]
    %v137 = vld [vmem:[#allocation5 + $0x140] sm:$0xff]
    %v138 = vld [vmem:[#allocation5 + $0x148] sm:$0xff]
    %v139 = vld [vmem:[#allocation5 + $0x150] sm:$0xff]
    %v140 = vld [vmem:[#allocation5 + $0x158] sm:$0xff]
    %v141 = vld [vmem:[#allocation5 + $0x160] sm:$0xff]
    %v142 = vld [vmem:[#allocation5 + $0x168] sm:$0xff]
    %v143 = vld [vmem:[#allocation5 + $0x170] sm:$0xff]
    %v144 = vld [vmem:[#allocation5 + $0x178] sm:$0xff]
    %v145 = vld [vmem:[#allocation5 + $0x180] sm:$0xff]
    %v146 = vld [vmem:[#allocation5 + $0x188] sm:$0xff]
    %v147 = vld [vmem:[#allocation5 + $0x190] sm:$0xff]
    %v148 = vld [vmem:[#allocation5 + $0x198] sm:$0xff]
    %v149 = vld [vmem:[#allocation5 + $0x1a0] sm:$0xff]
    %v150 = vld [vmem:[#allocation5 + $0x1a8] sm:$0xff]
    %v151 = vld [vmem:[#allocation5 + $0x1b0] sm:$0xff]
    %v152 = vld [vmem:[#allocation5 + $0x1b8] sm:$0xff]
    %v153 = vld [vmem:[#allocation5 + $0x1c0] sm:$0xff]
    %v154 = vld [vmem:[#allocation5 + $0x1c8] sm:$0xff]
    %v155 = vld [vmem:[#allocation5 + $0x1d0] sm:$0xff]
    %v156 = vld [vmem:[#allocation5 + $0x1d8] sm:$0xff]
    %v157 = vld [vmem:[#allocation5 + $0x1e0] sm:$0xff]
    %v158 = vld [vmem:[#allocation5 + $0x1e8] sm:$0xff]
    %v159 = vld [vmem:[#allocation5 + $0x1f0] sm:$0xff]
    %v160 = vld [vmem:[#allocation5 + $0x1f8] sm:$0xff]
    %v161 = vld [vmem:[#allocation7] sm:$0x3]
    %v163 = vperm.slane %v161, 0
    %v164 = vperm.slane %v161, 1
    %v231 = vunpack.c.l.b16 %v97
    %v232 = vunpack.c.h.b16 %v97
    %v233 = vunpack.c.l.b16 %v98
    %v234 = vunpack.c.h.b16 %v98
    %v235 = vunpack.c.l.b16 %v99
    %v236 = vunpack.c.h.b16 %v99
    %v237 = vunpack.c.l.b16 %v100
    %v238 = vunpack.c.h.b16 %v100
    %v239 = vunpack.c.l.b16 %v101
    %v240 = vunpack.c.h.b16 %v101
    %v241 = vunpack.c.l.b16 %v102
    %v242 = vunpack.c.h.b16 %v102
    %v243 = vunpack.c.l.b16 %v103
    %v244 = vunpack.c.h.b16 %v103
    %v245 = vunpack.c.l.b16 %v104
    %v246 = vunpack.c.h.b16 %v104
    %v247 = vunpack.c.l.b16 %v105
    %v248 = vunpack.c.h.b16 %v105
    %v249 = vunpack.c.l.b16 %v106
    %v250 = vunpack.c.h.b16 %v106
    %v251 = vunpack.c.l.b16 %v107
    %v252 = vunpack.c.h.b16 %v107
    %v253 = vunpack.c.l.b16 %v108
    %v254 = vunpack.c.h.b16 %v108
    %v255 = vunpack.c.l.b16 %v109
    %v256 = vunpack.c.h.b16 %v109
    %v257 = vunpack.c.l.b16 %v110
    %v258 = vunpack.c.h.b16 %v110
    %v259 = vunpack.c.l.b16 %v111
    %v260 = vunpack.c.h.b16 %v111
    %v261 = vunpack.c.l.b16 %v112
    %v262 = vunpack.c.h.b16 %v112
    %v263 = vunpack.c.l.b16 %v113
    %v264 = vunpack.c.h.b16 %v113
    %v265 = vunpack.c.l.b16 %v114
    %v266 = vunpack.c.h.b16 %v114
    %v267 = vunpack.c.l.b16 %v115
    %v268 = vunpack.c.h.b16 %v115
    %v269 = vunpack.c.l.b16 %v116
    %v270 = vunpack.c.h.b16 %v116
    %v271 = vunpack.c.l.b16 %v117
    %v272 = vunpack.c.h.b16 %v117
    %v273 = vunpack.c.l.b16 %v118
    %v274 = vunpack.c.h.b16 %v118
    %v275 = vunpack.c.l.b16 %v119
    %v276 = vunpack.c.h.b16 %v119
    %v277 = vunpack.c.l.b16 %v120
    %v278 = vunpack.c.h.b16 %v120
    %v279 = vunpack.c.l.b16 %v121
    %v280 = vunpack.c.h.b16 %v121
    %v281 = vunpack.c.l.b16 %v122
    %v282 = vunpack.c.h.b16 %v122
    %v283 = vunpack.c.l.b16 %v123
    %v284 = vunpack.c.h.b16 %v123
    %v285 = vunpack.c.l.b16 %v124
    %v286 = vunpack.c.h.b16 %v124
    %v287 = vunpack.c.l.b16 %v125
    %v288 = vunpack.c.h.b16 %v125
    %v289 = vunpack.c.l.b16 %v126
    %v290 = vunpack.c.h.b16 %v126
    %v291 = vunpack.c.l.b16 %v127
    %v292 = vunpack.c.h.b16 %v127
    %v293 = vunpack.c.l.b16 %v128
    %v294 = vunpack.c.h.b16 %v128
    %v295 = vunpack.c.l.b16 %v129
    %v296 = vunpack.c.h.b16 %v129
    %v297 = vunpack.c.l.b16 %v130
    %v298 = vunpack.c.h.b16 %v130
    %v299 = vunpack.c.l.b16 %v131
    %v300 = vunpack.c.h.b16 %v131
    %v301 = vunpack.c.l.b16 %v132
    %v302 = vunpack.c.h.b16 %v132
    %v303 = vunpack.c.l.b16 %v133
    %v304 = vunpack.c.h.b16 %v133
    %v305 = vunpack.c.l.b16 %v134
    %v306 = vunpack.c.h.b16 %v134
    %v307 = vunpack.c.l.b16 %v135
    %v308 = vunpack.c.h.b16 %v135
    %v309 = vunpack.c.l.b16 %v136
    %v310 = vunpack.c.h.b16 %v136
    %v311 = vunpack.c.l.b16 %v137
    %v312 = vunpack.c.h.b16 %v137
    %v313 = vunpack.c.l.b16 %v138
    %v314 = vunpack.c.h.b16 %v138
    %v315 = vunpack.c.l.b16 %v139
    %v316 = vunpack.c.h.b16 %v139
    %v317 = vunpack.c.l.b16 %v140
    %v318 = vunpack.c.h.b16 %v140
    %v319 = vunpack.c.l.b16 %v141
    %v320 = vunpack.c.h.b16 %v141
    %v321 = vunpack.c.l.b16 %v142
    %v322 = vunpack.c.h.b16 %v142
    %v323 = vunpack.c.l.b16 %v143
    %v324 = vunpack.c.h.b16 %v143
    %v325 = vunpack.c.l.b16 %v144
    %v326 = vunpack.c.h.b16 %v144
    %v327 = vunpack.c.l.b16 %v145
    %v328 = vunpack.c.h.b16 %v145
    %v329 = vunpack.c.l.b16 %v146
    %v330 = vunpack.c.h.b16 %v146
    %v331 = vunpack.c.l.b16 %v147
    %v332 = vunpack.c.h.b16 %v147
    %v333 = vunpack.c.l.b16 %v148
    %v334 = vunpack.c.h.b16 %v148
    %v335 = vunpack.c.l.b16 %v149
    %v336 = vunpack.c.h.b16 %v149
    %v337 = vunpack.c.l.b16 %v150
    %v338 = vunpack.c.h.b16 %v150
    %v339 = vunpack.c.l.b16 %v151
    %v340 = vunpack.c.h.b16 %v151
    %v341 = vunpack.c.l.b16 %v152
    %v342 = vunpack.c.h.b16 %v152
    %v343 = vunpack.c.l.b16 %v153
    %v344 = vunpack.c.h.b16 %v153
    %v345 = vunpack.c.l.b16 %v154
    %v346 = vunpack.c.h.b16 %v154
    %v347 = vunpack.c.l.b16 %v155
    %v348 = vunpack.c.h.b16 %v155
    %v349 = vunpack.c.l.b16 %v156
    %v350 = vunpack.c.h.b16 %v156
    %v351 = vunpack.c.l.b16 %v157
    %v352 = vunpack.c.h.b16 %v157
    %v353 = vunpack.c.l.b16 %v158
    %v354 = vunpack.c.h.b16 %v158
    %v355 = vunpack.c.l.b16 %v159
    %v356 = vunpack.c.h.b16 %v159
    %v357 = vunpack.c.l.b16 %v160
    %v358 = vunpack.c.h.b16 %v160
    %v359 = vpack.c.b16 %v233, %v231
    %v360 = vpack.c.b16 %v234, %v232
    %v361 = vpack.c.b16 %v237, %v235
    %v362 = vpack.c.b16 %v238, %v236
    %v363 = vpack.c.b16 %v241, %v239
    %v364 = vpack.c.b16 %v242, %v240
    %v365 = vpack.c.b16 %v245, %v243
    %v366 = vpack.c.b16 %v246, %v244
    %v367 = vpack.c.b16 %v249, %v247
    %v368 = vpack.c.b16 %v250, %v248
    %v369 = vpack.c.b16 %v253, %v251
    %v370 = vpack.c.b16 %v254, %v252
    %v371 = vpack.c.b16 %v257, %v255
    %v372 = vpack.c.b16 %v258, %v256
    %v373 = vpack.c.b16 %v261, %v259
    %v374 = vpack.c.b16 %v262, %v260
    %v375 = vpack.c.b16 %v265, %v263
    %v376 = vpack.c.b16 %v266, %v264
    %v377 = vpack.c.b16 %v269, %v267
    %v378 = vpack.c.b16 %v270, %v268
    %v379 = vpack.c.b16 %v273, %v271
    %v380 = vpack.c.b16 %v274, %v272
    %v381 = vpack.c.b16 %v277, %v275
    %v382 = vpack.c.b16 %v278, %v276
    %v383 = vpack.c.b16 %v281, %v279
    %v384 = vpack.c.b16 %v282, %v280
    %v385 = vpack.c.b16 %v285, %v283
    %v386 = vpack.c.b16 %v286, %v284
    %v387 = vpack.c.b16 %v289, %v287
    %v388 = vpack.c.b16 %v290, %v288
    %v389 = vpack.c.b16 %v293, %v291
    %v390 = vpack.c.b16 %v294, %v292
    %v391 = vpack.c.b16 %v297, %v295
    %v392 = vpack.c.b16 %v298, %v296
    %v393 = vpack.c.b16 %v301, %v299
    %v394 = vpack.c.b16 %v302, %v300
    %v395 = vpack.c.b16 %v305, %v303
    %v396 = vpack.c.b16 %v306, %v304
    %v397 = vpack.c.b16 %v309, %v307
    %v398 = vpack.c.b16 %v310, %v308
    %v399 = vpack.c.b16 %v313, %v311
    %v400 = vpack.c.b16 %v314, %v312
    %v401 = vpack.c.b16 %v317, %v315
    %v402 = vpack.c.b16 %v318, %v316
    %v403 = vpack.c.b16 %v321, %v319
    %v404 = vpack.c.b16 %v322, %v320
    %v405 = vpack.c.b16 %v325, %v323
    %v406 = vpack.c.b16 %v326, %v324
    %v407 = vpack.c.b16 %v329, %v327
    %v408 = vpack.c.b16 %v330, %v328
    %v409 = vpack.c.b16 %v333, %v331
    %v410 = vpack.c.b16 %v334, %v332
    %v411 = vpack.c.b16 %v337, %v335
    %v412 = vpack.c.b16 %v338, %v336
    %v413 = vpack.c.b16 %v341, %v339
    %v414 = vpack.c.b16 %v342, %v340
    %v415 = vpack.c.b16 %v345, %v343
    %v416 = vpack.c.b16 %v346, %v344
    %v417 = vpack.c.b16 %v349, %v347
    %v418 = vpack.c.b16 %v350, %v348
    %v419 = vpack.c.b16 %v353, %v351
    %v420 = vpack.c.b16 %v354, %v352
    %v421 = vpack.c.b16 %v357, %v355
    %v422 = vpack.c.b16 %v358, %v356
    %487 = vmatpush.bf16.msra.mxu0 %v373
    %488 = vmatpush.bf16.msra.mxu0 %v371
    %489 = vmatpush.bf16.msra.mxu0 %v369
    %490 = vmatpush.bf16.msra.mxu0 %v367
    %491 = vmatpush.bf16.msra.mxu0 %v365
    %492 = vmatpush.bf16.msra.mxu0 %v363
    %493 = vmatpush.bf16.msra.mxu0 %v361
    %494 = vmatpush.bf16.msra.mxu0 %v359
    %495 = vmatmul.bf16.gmra.mxu0 %v93
    %v496 = vpop.f32.mrf.mxu0
    %v497 = vadd.f32 %v163, %v496
    %v498 = vpop.f32.mrf.mxu0
    %v499 = vadd.f32 %v163, %v498
    %500 = vdwg.mxu0
    %501 = vmatpush.bf16.msra.mxu0 %v389
    %502 = vmatpush.bf16.msra.mxu0 %v387
    %503 = vmatpush.bf16.msra.mxu0 %v385
    %504 = vmatpush.bf16.msra.mxu0 %v383
    %505 = vmatpush.bf16.msra.mxu0 %v381
    %506 = vmatpush.bf16.msra.mxu0 %v379
    %507 = vmatpush.bf16.msra.mxu0 %v377
    %508 = vmatpush.bf16.msra.mxu0 %v375
    %509 = vmatmul.bf16.gmra.mxu0 %v94
    %v510 = vpop.f32.mrf.mxu0
    %v511 = vadd.f32 %v497, %v510
    %v512 = vpop.f32.mrf.mxu0
    %v513 = vadd.f32 %v499, %v512
    %514 = vdwg.mxu0
    %515 = vmatpush.bf16.msra.mxu0 %v405
    %516 = vmatpush.bf16.msra.mxu0 %v403
    %517 = vmatpush.bf16.msra.mxu0 %v401
    %518 = vmatpush.bf16.msra.mxu0 %v399
    %519 = vmatpush.bf16.msra.mxu0 %v397
    %520 = vmatpush.bf16.msra.mxu0 %v395
    %521 = vmatpush.bf16.msra.mxu0 %v393
    %522 = vmatpush.bf16.msra.mxu0 %v391
    %523 = vmatmul.bf16.gmra.mxu0 %v95
    %v524 = vpop.f32.mrf.mxu0
    %v525 = vadd.f32 %v511, %v524
    %v526 = vpop.f32.mrf.mxu0
    %v527 = vadd.f32 %v513, %v526
    %528 = vdwg.mxu0
    %529 = vmatpush.bf16.msra.mxu0 %v421
    %530 = vmatpush.bf16.msra.mxu0 %v419
    %531 = vmatpush.bf16.msra.mxu0 %v417
    %532 = vmatpush.bf16.msra.mxu0 %v415
    %533 = vmatpush.bf16.msra.mxu0 %v413
    %534 = vmatpush.bf16.msra.mxu0 %v411
    %535 = vmatpush.bf16.msra.mxu0 %v409
    %536 = vmatpush.bf16.msra.mxu0 %v407
    %537 = vmatmul.bf16.gmra.mxu0 %v96
    %v538 = vpop.f32.mrf.mxu0
    %v539 = vadd.f32 %v525, %v538
    %v540 = vpop.f32.mrf.mxu0
    %v541 = vadd.f32 %v527, %v540
    %542 = vdwg.mxu0
    %543 = vmatpush.bf16.msra.mxu0 %v374
    %544 = vmatpush.bf16.msra.mxu0 %v372
    %545 = vmatpush.bf16.msra.mxu0 %v370
    %546 = vmatpush.bf16.msra.mxu0 %v368
    %547 = vmatpush.bf16.msra.mxu0 %v366
    %548 = vmatpush.bf16.msra.mxu0 %v364
    %549 = vmatpush.bf16.msra.mxu0 %v362
    %550 = vmatpush.bf16.msra.mxu0 %v360
    %551 = vmatmul.bf16.gmra.mxu0 %v93
    %v552 = vpop.f32.mrf.mxu0
    %v553 = vadd.f32 %v164, %v552
    %v554 = vpop.f32.mrf.mxu0
    %v555 = vadd.f32 %v164, %v554
    %556 = vdwg.mxu0
    %557 = vmatpush.bf16.msra.mxu0 %v390
    %558 = vmatpush.bf16.msra.mxu0 %v388
    %559 = vmatpush.bf16.msra.mxu0 %v386
    %560 = vmatpush.bf16.msra.mxu0 %v384
    %561 = vmatpush.bf16.msra.mxu0 %v382
    %562 = vmatpush.bf16.msra.mxu0 %v380
    %563 = vmatpush.bf16.msra.mxu0 %v378
    %564 = vmatpush.bf16.msra.mxu0 %v376
    %565 = vmatmul.bf16.gmra.mxu0 %v94
    %v566 = vpop.f32.mrf.mxu0
    %v567 = vadd.f32 %v553, %v566
    %v568 = vpop.f32.mrf.mxu0
    %v569 = vadd.f32 %v555, %v568
    %570 = vdwg.mxu0
    %571 = vmatpush.bf16.msra.mxu0 %v406
    %572 = vmatpush.bf16.msra.mxu0 %v404
    %573 = vmatpush.bf16.msra.mxu0 %v402
    %574 = vmatpush.bf16.msra.mxu0 %v400
    %575 = vmatpush.bf16.msra.mxu0 %v398
    %576 = vmatpush.bf16.msra.mxu0 %v396
    %577 = vmatpush.bf16.msra.mxu0 %v394
    %578 = vmatpush.bf16.msra.mxu0 %v392
    %579 = vmatmul.bf16.gmra.mxu0 %v95
    %v580 = vpop.f32.mrf.mxu0
    %v581 = vadd.f32 %v567, %v580
    %v582 = vpop.f32.mrf.mxu0
    %v583 = vadd.f32 %v569, %v582
    %584 = vdwg.mxu0
    %585 = vmatpush.bf16.msra.mxu0 %v422
    %586 = vmatpush.bf16.msra.mxu0 %v420
    %587 = vmatpush.bf16.msra.mxu0 %v418
    %588 = vmatpush.bf16.msra.mxu0 %v416
    %589 = vmatpush.bf16.msra.mxu0 %v414
    %590 = vmatpush.bf16.msra.mxu0 %v412
    %591 = vmatpush.bf16.msra.mxu0 %v410
    %592 = vmatpush.bf16.msra.mxu0 %v408
    %593 = vmatmul.bf16.gmra.mxu0 %v96
    %v594 = vpop.f32.mrf.mxu0
    %v595 = vadd.f32 %v581, %v594
    %v596 = vpop.f32.mrf.mxu0
    %v597 = vadd.f32 %v583, %v596
    %598 = vdwg.mxu0
    %v599 = vld [vmem:[#allocation8] sm:$0xff]
    %v600 = vld [vmem:[#allocation8 + $0x8] sm:$0xff]
    %v601 = vld [vmem:[#allocation8 + $0x10] sm:$0xff]
    %v602 = vld [vmem:[#allocation8 + $0x18] sm:$0xff]
    %v603 = vadd.f32 %v539, %v599
    %v604 = vadd.f32 %v595, %v600
    %v605 = vadd.f32 %v541, %v601
    %v606 = vadd.f32 %v597, %v602
    %v607 = vadd.f32 %v603, %v604
    %608 = vadd.xlane.f32.xlu0 %v607
    %v609 = vpop.xlane.xlu0 %608
    %v610 = vadd.f32 %v605, %v606
    %611 = vadd.xlane.f32.xlu0 %v610
    %v612 = vpop.xlane.xlu0 %611
    %v613 = vrcp.pop 256.0
    %v614 = vmul.f32 256.0, %v613
    %v615 = vsub.f32 1.0, %v614
    %v616 = vmul.f32 %v613, %v615
    %v617 = vadd.f32 %v613, %v616
    %vm618 = vweird.f32 %v613
    %v619 = vsel %vm618, %v613, %v617
    %v620 = vmul.f32 %v609, %v619
    %v621 = vmul.f32 %v612, %v619
    %v622 = vsub.f32 %v603, %v620
    %v623 = vsub.f32 %v604, %v620
    %v624 = vsub.f32 %v605, %v621
    %v625 = vsub.f32 %v606, %v621
    %v626 = vmul.f32 %v622, %v622
    %v627 = vmul.f32 %v623, %v623
    %v628 = vmul.f32 %v624, %v624
    %v629 = vmul.f32 %v625, %v625
    %v630 = vadd.f32 %v626, %v627
    %631 = vadd.xlane.f32.xlu0 %v630
    %v632 = vpop.xlane.xlu0 %631
    %v633 = vadd.f32 %v628, %v629
    %634 = vadd.xlane.f32.xlu0 %v633
    %v635 = vpop.xlane.xlu0 %634
    %v636 = vmul.f32 %v632, %v619
    %v637 = vmul.f32 %v635, %v619
    %v638 = vld [vmem:[%s4] sm:$0x3]
    %v639 = vadd.f32 %v636, 1e-12
    %v640 = vadd.f32 %v637, 1e-12
    %v641 = vrsqrt.pop %v639
    %v642 = vmul.f32 %v641, %v639
    %v643 = vmul.f32 %v642, %v641
    %v644 = vmul.f32 0.5, %v643
    %v645 = vsub.f32 1.5, %v644
    %v646 = vmul.f32 %v641, %v645
    %vm647 = vweird.f32 %v639
    %vm648 = vweird.f32 %v641
    %vm649 = vmor %vm647, %vm648
    %v650 = vsel %vm649, %v641, %v646
    %v651 = vrsqrt.pop %v640
    %v652 = vmul.f32 %v651, %v640
    %v653 = vmul.f32 %v652, %v651
    %v654 = vmul.f32 0.5, %v653
    %v655 = vsub.f32 1.5, %v654
    %v656 = vmul.f32 %v651, %v655
    %vm657 = vweird.f32 %v640
    %vm658 = vweird.f32 %v651
    %vm659 = vmor %vm657, %vm658
    %v660 = vsel %vm659, %v651, %v656
    %v662 = vperm.slane %v638, 0
    %v663 = vperm.slane %v638, 1
    %v666 = vmul.f32 %v662, %v650
    %v667 = vmul.f32 %v663, %v650
    %v668 = vmul.f32 %v662, %v660
    %v669 = vmul.f32 %v663, %v660
    %v670 = vld [vmem:[%s5] sm:$0x3]
    %v671 = vmul.f32 %v620, %v666
    %v672 = vmul.f32 %v620, %v667
    %v673 = vmul.f32 %v621, %v668
    %v674 = vmul.f32 %v621, %v669
    %v676 = vperm.slane %v670, 0
    %v677 = vperm.slane %v670, 1
    %v680 = vsub.f32 %v676, %v671
    %v681 = vsub.f32 %v677, %v672
    %v682 = vsub.f32 %v676, %v673
    %v683 = vsub.f32 %v677, %v674
    %v684 = vmul.f32 %v603, %v666
    %v685 = vmul.f32 %v604, %v667
    %v686 = vmul.f32 %v605, %v668
    %v687 = vmul.f32 %v606, %v669
    %v688 = vadd.f32 %v684, %v680
    %v689 = vadd.f32 %v685, %v681
    %v690 = vadd.f32 %v686, %v682
    %v691 = vadd.f32 %v687, %v683
    %692 = vst [vmem:[#allocation10] sm:$0xff] %v688
    %693 = vst [vmem:[#allocation10 + $0x8] sm:$0xff] %v689
    %694 = vst [vmem:[#allocation10 + $0x10] sm:$0xff] %v690
    %695 = vst [vmem:[#allocation10 + $0x18] sm:$0xff] %v691
    // Predicated region
    $region42: #{tpu_custom_call.1} parent=1 // pred_check
      _
    $region43: #{tpu_custom_call.1} parent=1 // pred_check_branch
      %697 = sbr.rel (0) target = $region45
    $region44: #{tpu_custom_call.1} parent=1 // pred_region
      %699 = vsyncadd [#allocation4], 0
      %s700 = sshll.u32 [#allocation10], 4
      %s701 = int_to_ptr.vmem [resolvable:$true] %s700
      %s702 = sshll.u32 %s6, 4
      %s703 = int_to_ptr.hbm [resolvable:$true] %s702
      %708 = dma.vmem_to_hbm [thread:$0]  %s701, 512, %s703, [#allocation4], 256, 256, 16
    $region45: #{tpu_custom_call.1} parent=1 // pred_fallthru
      _
    // Predicated region
    $region46: #{tpu_custom_call.1} parent=1 // pred_check
      _
    $region47: #{tpu_custom_call.1} parent=1 // pred_check_branch
      %710 = sbr.rel (0) target = $region49
    $region48: #{tpu_custom_call.1} parent=1 // pred_region
      %712 = dma.done [#allocation4], 512
    $region49: #{tpu_custom_call.1} parent=1 // pred_fallthru
      _
    %713 = vsyncpa [#allocation3], 1
    %714 = vsyncpa [#allocation6], 1
    %715 = vsyncpa [#allocation9], 1
    %716 = vsyncpa [#allocation4], 1

// kernel: tpu_custom_call.1
$region0: #{tpu_custom_call.1}
  #allocation0 [shape = 'u32[]', space=smem, size = 0x4, offset = 0x4, fixed_abs, tag = 'smem constant byte address 0x4 - core index']
  #allocation1 [shape = 'u32[72,128]{1,0:T(1,128)}', space=vmem, size = 0x9000, scoped, tag = 'internal scratch']
  %s0 = inlined_call_operand.hbm [shape: f32[16,512], index: 0, kind: input, shape index: {}]
  %s1 = inlined_call_operand.hbm [shape: bf16[512,256], index: 1, kind: input, shape index: {}]
  %s2 = inlined_call_operand.hbm [shape: f32[1,256], index: 2, kind: input, shape index: {}]
  %s3 = inlined_call_operand.hbm [shape: f32[16,256], index: 3, kind: input, shape index: {}]
  %s4 = inlined_call_operand.vmem [shape: f32[1,256], index: 4, kind: input, shape index: {}]
  %s5 = inlined_call_operand.vmem [shape: f32[1,256], index: 5, kind: input, shape index: {}]
  %s6 = inlined_call_operand.hbm [shape: f32[16,256], index: 6, kind: output, shape index: {}]
  %s7 = sld [smem:[#allocation0]]
  $region50: #{tpu_custom_call.1} parent=0
    _
  %s9 = ssub.s32 1, %s7
  %s10 = scalar_select 0, %s9, %s7
  $region1: #{tpu_custom_call.1} parent=0
    #allocation2 [shape = 'u8[32768]{0}', space=vmem, size = 0x8000, scoped, tag = 'input window, operand 0, single buffered']
    #allocation3 [shape = 's32[1]{0}', space=sflag, size = 0x4, scoped, tag = 'scoped memory for tpu_custom_call.1']
    #allocation4 [shape = 's32[1]{0}', space=sflag, size = 0x4, scoped, tag = 'scoped memory for tpu_custom_call.1']
    #allocation5 [shape = 'u8[262144]{0}', space=vmem, size = 0x40000, scoped, tag = 'input window, operand 1, single buffered']
    #allocation6 [shape = 's32[1]{0}', space=sflag, size = 0x4, scoped, tag = 'scoped memory for tpu_custom_call.1']
    #allocation7 [shape = 'u8[1024]{0}', space=vmem, size = 0x400, scoped, tag = 'input window, operand 2, single buffered']
    #allocation8 [shape = 'u8[16384]{0}', space=vmem, size = 0x4000, scoped, tag = 'input window, operand 3, single buffered']
    #allocation9 [shape = 's32[1]{0}', space=sflag, size = 0x4, scoped, tag = 'scoped memory for tpu_custom_call.1']
    #allocation10 [shape = 'u8[16384]{0}', space=vmem, size = 0x4000, scoped, tag = 'output window, operand 0, single buffered']
    %11 = vsyncpa [#allocation3], 0
    %12 = vsyncpa [#allocation6], 0
    %13 = vsyncpa [#allocation9], 0
    %14 = vsyncpa [#allocation4], 0
    // Predicated region
    $region2: #{tpu_custom_call.1} parent=1 // pred_check
      _
    $region3: #{tpu_custom_call.1} parent=1 // pred_check_branch
      %16 = sbr.rel (0) target = $region5
    $region4: #{tpu_custom_call.1} parent=1 // pred_region
      %18 = vsyncadd [#allocation3], 0
      %s19 = sshll.u32 %s0, 4
      %s20 = int_to_ptr.hbm [resolvable:$true] %s19
      %s21 = sshll.u32 [#allocation2], 4
      %s22 = int_to_ptr.vmem [resolvable:$true] %s21
      %27 = dma.hbm_to_vmem [thread:$0]  %s20, 1024, %s22, [#allocation3], 512, 512, 32
    $region5: #{tpu_custom_call.1} parent=1 // pred_fallthru
      _
    // Predicated region
    $region6: #{tpu_custom_call.1} parent=1 // pred_check
      _
    $region7: #{tpu_custom_call.1} parent=1 // pred_check_branch
      %29 = sbr.rel (0) target = $region9
    $region8: #{tpu_custom_call.1} parent=1 // pred_region
      %31 = vsyncadd [#allocation6], 0
      %s32 = sshll.u32 %s1, 4
      %s33 = int_to_ptr.hbm [resolvable:$true] %s32
      %s34 = sshll.u32 [#allocation5], 4
      %s35 = int_to_ptr.vmem [resolvable:$true] %s34
      %40 = dma.hbm_to_vmem [thread:$0]  %s33, 8192, %s35, [#allocation6], 128, 128, 8
    $region9: #{tpu_custom_call.1} parent=1 // pred_fallthru
      _
    // Predicated region
    $region10: #{tpu_custom_call.1} parent=1 // pred_check
      _
    $region11: #{tpu_custom_call.1} parent=1 // pred_check_branch
      %42 = sbr.rel (0) target = $region13
    $region12: #{tpu_custom_call.1} parent=1 // pred_region
      %44 = vsyncadd [#allocation6], 0
      %s46 = sshll.u32 %s2, 4
      %s47 = int_to_ptr.hbm [resolvable:$true] %s46
      %s48 = sshll.u32 [#allocation7], 4
      %s49 = int_to_ptr.vmem [resolvable:$true] %s48
      %51 = dma.hbm_to_vmem [thread:$0]  %s47, 32, %s49, [#allocation6]
    $region13: #{tpu_custom_call.1} parent=1 // pred_fallthru
      _
    // Predicated region
    $region14: #{tpu_custom_call.1} parent=1 // pred_check
      _
    $region15: #{tpu_custom_call.1} parent=1 // pred_check_branch
      %53 = sbr.rel (0) target = $region17
    $region16: #{tpu_custom_call.1} parent=1 // pred_region
      %55 = vsyncadd [#allocation9], 0
      %s56 = sshll.u32 %s3, 4
      %s57 = int_to_ptr.hbm [resolvable:$true] %s56
      %s58 = sshll.u32 [#allocation8], 4
      %s59 = int_to_ptr.vmem [resolvable:$true] %s58
      %64 = dma.hbm_to_vmem [thread:$0]  %s57, 512, %s59, [#allocation9], 256, 256, 16
    $region17: #{tpu_custom_call.1} parent=1 // pred_fallthru
      _
    // Predicated region
    $region18: #{tpu_custom_call.1} parent=1 // pred_check
      _
    $region19: #{tpu_custom_call.1} parent=1 // pred_check_branch
      %66 = sbr.rel (0) target = $region21
    $region20: #{tpu_custom_call.1} parent=1 // pred_region
      _
    $region21: #{tpu_custom_call.1} parent=1 // pred_fallthru
      _
    // Predicated region
    $region22: #{tpu_custom_call.1} parent=1 // pred_check
      _
    $region23: #{tpu_custom_call.1} parent=1 // pred_check_branch
      %68 = sbr.rel (0) target = $region25
    $region24: #{tpu_custom_call.1} parent=1 // pred_region
      _
    $region25: #{tpu_custom_call.1} parent=1 // pred_fallthru
      _
    // Predicated region
    $region26: #{tpu_custom_call.1} parent=1 // pred_check
      _
    $region27: #{tpu_custom_call.1} parent=1 // pred_check_branch
      %70 = sbr.rel (0) target = $region29
    $region28: #{tpu_custom_call.1} parent=1 // pred_region
      %72 = dma.done [#allocation3], 1024
    $region29: #{tpu_custom_call.1} parent=1 // pred_fallthru
      _
    // Predicated region
    $region30: #{tpu_custom_call.1} parent=1 // pred_check
      _
    $region31: #{tpu_custom_call.1} parent=1 // pred_check_branch
      %74 = sbr.rel (0) target = $region33
    $region32: #{tpu_custom_call.1} parent=1 // pred_region
      %76 = dma.done [#allocation6], 8192
    $region33: #{tpu_custom_call.1} parent=1 // pred_fallthru
      _
    // Predicated region
    $region34: #{tpu_custom_call.1} parent=1 // pred_check
      _
    $region35: #{tpu_custom_call.1} parent=1 // pred_check_branch
      %78 = sbr.rel (0) target = $region37
    $region36: #{tpu_custom_call.1} parent=1 // pred_region
      %80 = dma.done [#allocation6], 32
    $region37: #{tpu_custom_call.1} parent=1 // pred_fallthru
      _
    // Predicated region
    $region38: #{tpu_custom_call.1} parent=1 // pred_check
      _
    $region39: #{tpu_custom_call.1} parent=1 // pred_check_branch
      %82 = sbr.rel (0) target = $region41
    $region40: #{tpu_custom_call.1} parent=1 // pred_region
      %84 = dma.done [#allocation9], 512
    $region41: #{tpu_custom_call.1} parent=1 // pred_fallthru
      _
    %v85 = vld [vmem:[#allocation2] sm:$0xff]
    %v86 = vld [vmem:[#allocation2 + $0x8] sm:$0xff]
    %v87 = vld [vmem:[#allocation2 + $0x10] sm:$0xff]
    %v88 = vld [vmem:[#allocation2 + $0x18] sm:$0xff]
    %v89 = vld [vmem:[#allocation2 + $0x20] sm:$0xff]
    %v90 = vld [vmem:[#allocation2 + $0x28] sm:$0xff]
    %v91 = vld [vmem:[#allocation2 + $0x30] sm:$0xff]
    %v92 = vld [vmem:[#allocation2 + $0x38] sm:$0xff]
    %v93 = vpack.c.bf16 %v89, %v85
    %v94 = vpack.c.bf16 %v90, %v86
    %v95 = vpack.c.bf16 %v91, %v87
    %v96 = vpack.c.bf16 %v92, %v88
    %v97 = vld [vmem:[#allocation5] sm:$0xff]
    %v98 = vld [vmem:[#allocation5 + $0x8] sm:$0xff]
    %v99 = vld [vmem:[#allocation5 + $0x10] sm:$0xff]
    %v100 = vld [vmem:[#allocation5 + $0x18] sm:$0xff]
    %v101 = vld [vmem:[#allocation5 + $0x20] sm:$0xff]
    %v102 = vld [vmem:[#allocation5 + $0x28] sm:$0xff]
    %v103 = vld [vmem:[#allocation5 + $0x30] sm:$0xff]
    %v104 = vld [vmem:[#allocation5 + $0x38] sm:$0xff]
    %v105 = vld [vmem:[#allocation5 + $0x40] sm:$0xff]
    %v106 = vld [vmem:[#allocation5 + $0x48] sm:$0xff]
    %v107 = vld [vmem:[#allocation5 + $0x50] sm:$0xff]
    %v108 = vld [vmem:[#allocation5 + $0x58] sm:$0xff]
    %v109 = vld [vmem:[#allocation5 + $0x60] sm:$0xff]
    %v110 = vld [vmem:[#allocation5 + $0x68] sm:$0xff]
    %v111 = vld [vmem:[#allocation5 + $0x70] sm:$0xff]
    %v112 = vld [vmem:[#allocation5 + $0x78] sm:$0xff]
    %v113 = vld [vmem:[#allocation5 + $0x80] sm:$0xff]
    %v114 = vld [vmem:[#allocation5 + $0x88] sm:$0xff]
    %v115 = vld [vmem:[#allocation5 + $0x90] sm:$0xff]
    %v116 = vld [vmem:[#allocation5 + $0x98] sm:$0xff]
    %v117 = vld [vmem:[#allocation5 + $0xa0] sm:$0xff]
    %v118 = vld [vmem:[#allocation5 + $0xa8] sm:$0xff]
    %v119 = vld [vmem:[#allocation5 + $0xb0] sm:$0xff]
    %v120 = vld [vmem:[#allocation5 + $0xb8] sm:$0xff]
    %v121 = vld [vmem:[#allocation5 + $0xc0] sm:$0xff]
    %v122 = vld [vmem:[#allocation5 + $0xc8] sm:$0xff]
    %v123 = vld [vmem:[#allocation5 + $0xd0] sm:$0xff]
    %v124 = vld [vmem:[#allocation5 + $0xd8] sm:$0xff]
    %v125 = vld [vmem:[#allocation5 + $0xe0] sm:$0xff]
    %v126 = vld [vmem:[#allocation5 + $0xe8] sm:$0xff]
    %v127 = vld [vmem:[#allocation5 + $0xf0] sm:$0xff]
    %v128 = vld [vmem:[#allocation5 + $0xf8] sm:$0xff]
    %v129 = vld [vmem:[#allocation5 + $0x100] sm:$0xff]
    %v130 = vld [vmem:[#allocation5 + $0x108] sm:$0xff]
    %v131 = vld [vmem:[#allocation5 + $0x110] sm:$0xff]
    %v132 = vld [vmem:[#allocation5 + $0x118] sm:$0xff]
    %v133 = vld [vmem:[#allocation5 + $0x120] sm:$0xff]
    %v134 = vld [vmem:[#allocation5 + $0x128] sm:$0xff]
    %v135 = vld [vmem:[#allocation5 + $0x130] sm:$0xff]
    %v136 = vld [vmem:[#allocation5 + $0x138] sm:$0xff]
    %v137 = vld [vmem:[#allocation5 + $0x140] sm:$0xff]
    %v138 = vld [vmem:[#allocation5 + $0x148] sm:$0xff]
    %v139 = vld [vmem:[#allocation5 + $0x150] sm:$0xff]
    %v140 = vld [vmem:[#allocation5 + $0x158] sm:$0xff]
    %v141 = vld [vmem:[#allocation5 + $0x160] sm:$0xff]
    %v142 = vld [vmem:[#allocation5 + $0x168] sm:$0xff]
    %v143 = vld [vmem:[#allocation5 + $0x170] sm:$0xff]
    %v144 = vld [vmem:[#allocation5 + $0x178] sm:$0xff]
    %v145 = vld [vmem:[#allocation5 + $0x180] sm:$0xff]
    %v146 = vld [vmem:[#allocation5 + $0x188] sm:$0xff]
    %v147 = vld [vmem:[#allocation5 + $0x190] sm:$0xff]
    %v148 = vld [vmem:[#allocation5 + $0x198] sm:$0xff]
    %v149 = vld [vmem:[#allocation5 + $0x1a0] sm:$0xff]
    %v150 = vld [vmem:[#allocation5 + $0x1a8] sm:$0xff]
    %v151 = vld [vmem:[#allocation5 + $0x1b0] sm:$0xff]
    %v152 = vld [vmem:[#allocation5 + $0x1b8] sm:$0xff]
    %v153 = vld [vmem:[#allocation5 + $0x1c0] sm:$0xff]
    %v154 = vld [vmem:[#allocation5 + $0x1c8] sm:$0xff]
    %v155 = vld [vmem:[#allocation5 + $0x1d0] sm:$0xff]
    %v156 = vld [vmem:[#allocation5 + $0x1d8] sm:$0xff]
    %v157 = vld [vmem:[#allocation5 + $0x1e0] sm:$0xff]
    %v158 = vld [vmem:[#allocation5 + $0x1e8] sm:$0xff]
    %v159 = vld [vmem:[#allocation5 + $0x1f0] sm:$0xff]
    %v160 = vld [vmem:[#allocation5 + $0x1f8] sm:$0xff]
    %v161 = vld [vmem:[#allocation7] sm:$0x3]
    %v163 = vperm.slane %v161, 0
    %v164 = vperm.slane %v161, 1
    %v231 = vunpack.c.l.b16 %v97
    %v232 = vunpack.c.h.b16 %v97
    %v233 = vunpack.c.l.b16 %v98
    %v234 = vunpack.c.h.b16 %v98
    %v235 = vunpack.c.l.b16 %v99
    %v236 = vunpack.c.h.b16 %v99
    %v237 = vunpack.c.l.b16 %v100
    %v238 = vunpack.c.h.b16 %v100
    %v239 = vunpack.c.l.b16 %v101
    %v240 = vunpack.c.h.b16 %v101
    %v241 = vunpack.c.l.b16 %v102
    %v242 = vunpack.c.h.b16 %v102
    %v243 = vunpack.c.l.b16 %v103
    %v244 = vunpack.c.h.b16 %v103
    %v245 = vunpack.c.l.b16 %v104
    %v246 = vunpack.c.h.b16 %v104
    %v247 = vunpack.c.l.b16 %v105
    %v248 = vunpack.c.h.b16 %v105
    %v249 = vunpack.c.l.b16 %v106
    %v250 = vunpack.c.h.b16 %v106
    %v251 = vunpack.c.l.b16 %v107
    %v252 = vunpack.c.h.b16 %v107
    %v253 = vunpack.c.l.b16 %v108
    %v254 = vunpack.c.h.b16 %v108
    %v255 = vunpack.c.l.b16 %v109
    %v256 = vunpack.c.h.b16 %v109
    %v257 = vunpack.c.l.b16 %v110
    %v258 = vunpack.c.h.b16 %v110
    %v259 = vunpack.c.l.b16 %v111
    %v260 = vunpack.c.h.b16 %v111
    %v261 = vunpack.c.l.b16 %v112
    %v262 = vunpack.c.h.b16 %v112
    %v263 = vunpack.c.l.b16 %v113
    %v264 = vunpack.c.h.b16 %v113
    %v265 = vunpack.c.l.b16 %v114
    %v266 = vunpack.c.h.b16 %v114
    %v267 = vunpack.c.l.b16 %v115
    %v268 = vunpack.c.h.b16 %v115
    %v269 = vunpack.c.l.b16 %v116
    %v270 = vunpack.c.h.b16 %v116
    %v271 = vunpack.c.l.b16 %v117
    %v272 = vunpack.c.h.b16 %v117
    %v273 = vunpack.c.l.b16 %v118
    %v274 = vunpack.c.h.b16 %v118
    %v275 = vunpack.c.l.b16 %v119
    %v276 = vunpack.c.h.b16 %v119
    %v277 = vunpack.c.l.b16 %v120
    %v278 = vunpack.c.h.b16 %v120
    %v279 = vunpack.c.l.b16 %v121
    %v280 = vunpack.c.h.b16 %v121
    %v281 = vunpack.c.l.b16 %v122
    %v282 = vunpack.c.h.b16 %v122
    %v283 = vunpack.c.l.b16 %v123
    %v284 = vunpack.c.h.b16 %v123
    %v285 = vunpack.c.l.b16 %v124
    %v286 = vunpack.c.h.b16 %v124
    %v287 = vunpack.c.l.b16 %v125
    %v288 = vunpack.c.h.b16 %v125
    %v289 = vunpack.c.l.b16 %v126
    %v290 = vunpack.c.h.b16 %v126
    %v291 = vunpack.c.l.b16 %v127
    %v292 = vunpack.c.h.b16 %v127
    %v293 = vunpack.c.l.b16 %v128
    %v294 = vunpack.c.h.b16 %v128
    %v295 = vunpack.c.l.b16 %v129
    %v296 = vunpack.c.h.b16 %v129
    %v297 = vunpack.c.l.b16 %v130
    %v298 = vunpack.c.h.b16 %v130
    %v299 = vunpack.c.l.b16 %v131
    %v300 = vunpack.c.h.b16 %v131
    %v301 = vunpack.c.l.b16 %v132
    %v302 = vunpack.c.h.b16 %v132
    %v303 = vunpack.c.l.b16 %v133
    %v304 = vunpack.c.h.b16 %v133
    %v305 = vunpack.c.l.b16 %v134
    %v306 = vunpack.c.h.b16 %v134
    %v307 = vunpack.c.l.b16 %v135
    %v308 = vunpack.c.h.b16 %v135
    %v309 = vunpack.c.l.b16 %v136
    %v310 = vunpack.c.h.b16 %v136
    %v311 = vunpack.c.l.b16 %v137
    %v312 = vunpack.c.h.b16 %v137
    %v313 = vunpack.c.l.b16 %v138
    %v314 = vunpack.c.h.b16 %v138
    %v315 = vunpack.c.l.b16 %v139
    %v316 = vunpack.c.h.b16 %v139
    %v317 = vunpack.c.l.b16 %v140
    %v318 = vunpack.c.h.b16 %v140
    %v319 = vunpack.c.l.b16 %v141
    %v320 = vunpack.c.h.b16 %v141
    %v321 = vunpack.c.l.b16 %v142
    %v322 = vunpack.c.h.b16 %v142
    %v323 = vunpack.c.l.b16 %v143
    %v324 = vunpack.c.h.b16 %v143
    %v325 = vunpack.c.l.b16 %v144
    %v326 = vunpack.c.h.b16 %v144
    %v327 = vunpack.c.l.b16 %v145
    %v328 = vunpack.c.h.b16 %v145
    %v329 = vunpack.c.l.b16 %v146
    %v330 = vunpack.c.h.b16 %v146
    %v331 = vunpack.c.l.b16 %v147
    %v332 = vunpack.c.h.b16 %v147
    %v333 = vunpack.c.l.b16 %v148
    %v334 = vunpack.c.h.b16 %v148
    %v335 = vunpack.c.l.b16 %v149
    %v336 = vunpack.c.h.b16 %v149
    %v337 = vunpack.c.l.b16 %v150
    %v338 = vunpack.c.h.b16 %v150
    %v339 = vunpack.c.l.b16 %v151
    %v340 = vunpack.c.h.b16 %v151
    %v341 = vunpack.c.l.b16 %v152
    %v342 = vunpack.c.h.b16 %v152
    %v343 = vunpack.c.l.b16 %v153
    %v344 = vunpack.c.h.b16 %v153
    %v345 = vunpack.c.l.b16 %v154
    %v346 = vunpack.c.h.b16 %v154
    %v347 = vunpack.c.l.b16 %v155
    %v348 = vunpack.c.h.b16 %v155
    %v349 = vunpack.c.l.b16 %v156
    %v350 = vunpack.c.h.b16 %v156
    %v351 = vunpack.c.l.b16 %v157
    %v352 = vunpack.c.h.b16 %v157
    %v353 = vunpack.c.l.b16 %v158
    %v354 = vunpack.c.h.b16 %v158
    %v355 = vunpack.c.l.b16 %v159
    %v356 = vunpack.c.h.b16 %v159
    %v357 = vunpack.c.l.b16 %v160
    %v358 = vunpack.c.h.b16 %v160
    %v359 = vpack.c.b16 %v233, %v231
    %v360 = vpack.c.b16 %v234, %v232
    %v361 = vpack.c.b16 %v237, %v235
    %v362 = vpack.c.b16 %v238, %v236
    %v363 = vpack.c.b16 %v241, %v239
    %v364 = vpack.c.b16 %v242, %v240
    %v365 = vpack.c.b16 %v245, %v243
    %v366 = vpack.c.b16 %v246, %v244
    %v367 = vpack.c.b16 %v249, %v247
    %v368 = vpack.c.b16 %v250, %v248
    %v369 = vpack.c.b16 %v253, %v251
    %v370 = vpack.c.b16 %v254, %v252
    %v371 = vpack.c.b16 %v257, %v255
    %v372 = vpack.c.b16 %v258, %v256
    %v373 = vpack.c.b16 %v261, %v259
    %v374 = vpack.c.b16 %v262, %v260
    %v375 = vpack.c.b16 %v265, %v263
    %v376 = vpack.c.b16 %v266, %v264
    %v377 = vpack.c.b16 %v269, %v267
    %v378 = vpack.c.b16 %v270, %v268
    %v379 = vpack.c.b16 %v273, %v271
    %v380 = vpack.c.b16 %v274, %v272
    %v381 = vpack.c.b16 %v277, %v275
    %v382 = vpack.c.b16 %v278, %v276
    %v383 = vpack.c.b16 %v281, %v279
    %v384 = vpack.c.b16 %v282, %v280
    %v385 = vpack.c.b16 %v285, %v283
    %v386 = vpack.c.b16 %v286, %v284
    %v387 = vpack.c.b16 %v289, %v287
    %v388 = vpack.c.b16 %v290, %v288
    %v389 = vpack.c.b16 %v293, %v291
    %v390 = vpack.c.b16 %v294, %v292
    %v391 = vpack.c.b16 %v297, %v295
    %v392 = vpack.c.b16 %v298, %v296
    %v393 = vpack.c.b16 %v301, %v299
    %v394 = vpack.c.b16 %v302, %v300
    %v395 = vpack.c.b16 %v305, %v303
    %v396 = vpack.c.b16 %v306, %v304
    %v397 = vpack.c.b16 %v309, %v307
    %v398 = vpack.c.b16 %v310, %v308
    %v399 = vpack.c.b16 %v313, %v311
    %v400 = vpack.c.b16 %v314, %v312
    %v401 = vpack.c.b16 %v317, %v315
    %v402 = vpack.c.b16 %v318, %v316
    %v403 = vpack.c.b16 %v321, %v319
    %v404 = vpack.c.b16 %v322, %v320
    %v405 = vpack.c.b16 %v325, %v323
    %v406 = vpack.c.b16 %v326, %v324
    %v407 = vpack.c.b16 %v329, %v327
    %v408 = vpack.c.b16 %v330, %v328
    %v409 = vpack.c.b16 %v333, %v331
    %v410 = vpack.c.b16 %v334, %v332
    %v411 = vpack.c.b16 %v337, %v335
    %v412 = vpack.c.b16 %v338, %v336
    %v413 = vpack.c.b16 %v341, %v339
    %v414 = vpack.c.b16 %v342, %v340
    %v415 = vpack.c.b16 %v345, %v343
    %v416 = vpack.c.b16 %v346, %v344
    %v417 = vpack.c.b16 %v349, %v347
    %v418 = vpack.c.b16 %v350, %v348
    %v419 = vpack.c.b16 %v353, %v351
    %v420 = vpack.c.b16 %v354, %v352
    %v421 = vpack.c.b16 %v357, %v355
    %v422 = vpack.c.b16 %v358, %v356
    %487 = vmatpush.bf16.msra.mxu0 %v373
    %488 = vmatpush.bf16.msra.mxu0 %v371
    %489 = vmatpush.bf16.msra.mxu0 %v369
    %490 = vmatpush.bf16.msra.mxu0 %v367
    %491 = vmatpush.bf16.msra.mxu0 %v365
    %492 = vmatpush.bf16.msra.mxu0 %v363
    %493 = vmatpush.bf16.msra.mxu0 %v361
    %494 = vmatpush.bf16.msra.mxu0 %v359
    %495 = vmatmul.bf16.gmra.mxu0 %v93
    %v496 = vpop.f32.mrf.mxu0
    %v497 = vadd.f32 %v163, %v496
    %v498 = vpop.f32.mrf.mxu0
    %v499 = vadd.f32 %v163, %v498
    %500 = vdwg.mxu0
    %501 = vmatpush.bf16.msra.mxu0 %v389
    %502 = vmatpush.bf16.msra.mxu0 %v387
    %503 = vmatpush.bf16.msra.mxu0 %v385
    %504 = vmatpush.bf16.msra.mxu0 %v383
    %505 = vmatpush.bf16.msra.mxu0 %v381
    %506 = vmatpush.bf16.msra.mxu0 %v379
    %507 = vmatpush.bf16.msra.mxu0 %v377
    %508 = vmatpush.bf16.msra.mxu0 %v375
    %509 = vmatmul.bf16.gmra.mxu0 %v94
    %v510 = vpop.f32.mrf.mxu0
    %v511 = vadd.f32 %v497, %v510
    %v512 = vpop.f32.mrf.mxu0
    %v513 = vadd.f32 %v499, %v512
    %514 = vdwg.mxu0
    %515 = vmatpush.bf16.msra.mxu0 %v405
    %516 = vmatpush.bf16.msra.mxu0 %v403
    %517 = vmatpush.bf16.msra.mxu0 %v401
    %518 = vmatpush.bf16.msra.mxu0 %v399
    %519 = vmatpush.bf16.msra.mxu0 %v397
    %520 = vmatpush.bf16.msra.mxu0 %v395
    %521 = vmatpush.bf16.msra.mxu0 %v393
    %522 = vmatpush.bf16.msra.mxu0 %v391
    %523 = vmatmul.bf16.gmra.mxu0 %v95
    %v524 = vpop.f32.mrf.mxu0
    %v525 = vadd.f32 %v511, %v524
    %v526 = vpop.f32.mrf.mxu0
    %v527 = vadd.f32 %v513, %v526
    %528 = vdwg.mxu0
    %529 = vmatpush.bf16.msra.mxu0 %v421
    %530 = vmatpush.bf16.msra.mxu0 %v419
    %531 = vmatpush.bf16.msra.mxu0 %v417
    %532 = vmatpush.bf16.msra.mxu0 %v415
    %533 = vmatpush.bf16.msra.mxu0 %v413
    %534 = vmatpush.bf16.msra.mxu0 %v411
    %535 = vmatpush.bf16.msra.mxu0 %v409
    %536 = vmatpush.bf16.msra.mxu0 %v407
    %537 = vmatmul.bf16.gmra.mxu0 %v96
    %v538 = vpop.f32.mrf.mxu0
    %v539 = vadd.f32 %v525, %v538
    %v540 = vpop.f32.mrf.mxu0
    %v541 = vadd.f32 %v527, %v540
    %542 = vdwg.mxu0
    %543 = vmatpush.bf16.msra.mxu0 %v374
    %544 = vmatpush.bf16.msra.mxu0 %v372
    %545 = vmatpush.bf16.msra.mxu0 %v370
    %546 = vmatpush.bf16.msra.mxu0 %v368
    %547 = vmatpush.bf16.msra.mxu0 %v366
    %548 = vmatpush.bf16.msra.mxu0 %v364
    %549 = vmatpush.bf16.msra.mxu0 %v362
    %550 = vmatpush.bf16.msra.mxu0 %v360
    %551 = vmatmul.bf16.gmra.mxu0 %v93
    %v552 = vpop.f32.mrf.mxu0
    %v553 = vadd.f32 %v164, %v552
    %v554 = vpop.f32.mrf.mxu0
    %v555 = vadd.f32 %v164, %v554
    %556 = vdwg.mxu0
    %557 = vmatpush.bf16.msra.mxu0 %v390
    %558 = vmatpush.bf16.msra.mxu0 %v388
    %559 = vmatpush.bf16.msra.mxu0 %v386
    %560 = vmatpush.bf16.msra.mxu0 %v384
    %561 = vmatpush.bf16.msra.mxu0 %v382
    %562 = vmatpush.bf16.msra.mxu0 %v380
    %563 = vmatpush.bf16.msra.mxu0 %v378
    %564 = vmatpush.bf16.msra.mxu0 %v376
    %565 = vmatmul.bf16.gmra.mxu0 %v94
    %v566 = vpop.f32.mrf.mxu0
    %v567 = vadd.f32 %v553, %v566
    %v568 = vpop.f32.mrf.mxu0
    %v569 = vadd.f32 %v555, %v568
    %570 = vdwg.mxu0
    %571 = vmatpush.bf16.msra.mxu0 %v406
    %572 = vmatpush.bf16.msra.mxu0 %v404
    %573 = vmatpush.bf16.msra.mxu0 %v402
    %574 = vmatpush.bf16.msra.mxu0 %v400
    %575 = vmatpush.bf16.msra.mxu0 %v398
    %576 = vmatpush.bf16.msra.mxu0 %v396
    %577 = vmatpush.bf16.msra.mxu0 %v394
    %578 = vmatpush.bf16.msra.mxu0 %v392
    %579 = vmatmul.bf16.gmra.mxu0 %v95
    %v580 = vpop.f32.mrf.mxu0
    %v581 = vadd.f32 %v567, %v580
    %v582 = vpop.f32.mrf.mxu0
    %v583 = vadd.f32 %v569, %v582
    %584 = vdwg.mxu0
    %585 = vmatpush.bf16.msra.mxu0 %v422
    %586 = vmatpush.bf16.msra.mxu0 %v420
    %587 = vmatpush.bf16.msra.mxu0 %v418
    %588 = vmatpush.bf16.msra.mxu0 %v416
    %589 = vmatpush.bf16.msra.mxu0 %v414
    %590 = vmatpush.bf16.msra.mxu0 %v412
    %591 = vmatpush.bf16.msra.mxu0 %v410
    %592 = vmatpush.bf16.msra.mxu0 %v408
    %593 = vmatmul.bf16.gmra.mxu0 %v96
    %v594 = vpop.f32.mrf.mxu0
    %v595 = vadd.f32 %v581, %v594
    %v596 = vpop.f32.mrf.mxu0
    %v597 = vadd.f32 %v583, %v596
    %598 = vdwg.mxu0
    %v599 = vld [vmem:[#allocation8] sm:$0xff]
    %v600 = vld [vmem:[#allocation8 + $0x8] sm:$0xff]
    %v601 = vld [vmem:[#allocation8 + $0x10] sm:$0xff]
    %v602 = vld [vmem:[#allocation8 + $0x18] sm:$0xff]
    %v603 = vadd.f32 %v539, %v599
    %v604 = vadd.f32 %v595, %v600
    %v605 = vadd.f32 %v541, %v601
    %v606 = vadd.f32 %v597, %v602
    %v607 = vadd.f32 %v603, %v604
    %608 = vadd.xlane.f32.xlu0 %v607
    %v609 = vpop.xlane.xlu0 %608
    %v610 = vadd.f32 %v605, %v606
    %611 = vadd.xlane.f32.xlu0 %v610
    %v612 = vpop.xlane.xlu0 %611
    %v613 = vrcp.pop 256.0
    %v614 = vmul.f32 256.0, %v613
    %v615 = vsub.f32 1.0, %v614
    %v616 = vmul.f32 %v613, %v615
    %v617 = vadd.f32 %v613, %v616
    %vm618 = vweird.f32 %v613
    %v619 = vsel %vm618, %v613, %v617
    %v620 = vmul.f32 %v609, %v619
    %v621 = vmul.f32 %v612, %v619
    %v622 = vsub.f32 %v603, %v620
    %v623 = vsub.f32 %v604, %v620
    %v624 = vsub.f32 %v605, %v621
    %v625 = vsub.f32 %v606, %v621
    %v626 = vmul.f32 %v622, %v622
    %v627 = vmul.f32 %v623, %v623
    %v628 = vmul.f32 %v624, %v624
    %v629 = vmul.f32 %v625, %v625
    %v630 = vadd.f32 %v626, %v627
    %631 = vadd.xlane.f32.xlu0 %v630
    %v632 = vpop.xlane.xlu0 %631
    %v633 = vadd.f32 %v628, %v629
    %634 = vadd.xlane.f32.xlu0 %v633
    %v635 = vpop.xlane.xlu0 %634
    %v636 = vmul.f32 %v632, %v619
    %v637 = vmul.f32 %v635, %v619
    %v638 = vld [vmem:[%s4] sm:$0x3]
    %v639 = vadd.f32 %v636, 1e-12
    %v640 = vadd.f32 %v637, 1e-12
    %v641 = vrsqrt.pop %v639
    %v642 = vmul.f32 %v641, %v639
    %v643 = vmul.f32 %v642, %v641
    %v644 = vmul.f32 0.5, %v643
    %v645 = vsub.f32 1.5, %v644
    %v646 = vmul.f32 %v641, %v645
    %vm647 = vweird.f32 %v639
    %vm648 = vweird.f32 %v641
    %vm649 = vmor %vm647, %vm648
    %v650 = vsel %vm649, %v641, %v646
    %v651 = vrsqrt.pop %v640
    %v652 = vmul.f32 %v651, %v640
    %v653 = vmul.f32 %v652, %v651
    %v654 = vmul.f32 0.5, %v653
    %v655 = vsub.f32 1.5, %v654
    %v656 = vmul.f32 %v651, %v655
    %vm657 = vweird.f32 %v640
    %vm658 = vweird.f32 %v651
    %vm659 = vmor %vm657, %vm658
    %v660 = vsel %vm659, %v651, %v656
    %v662 = vperm.slane %v638, 0
    %v663 = vperm.slane %v638, 1
    %v666 = vmul.f32 %v662, %v650
    %v667 = vmul.f32 %v663, %v650
    %v668 = vmul.f32 %v662, %v660
    %v669 = vmul.f32 %v663, %v660
    %v670 = vld [vmem:[%s5] sm:$0x3]
    %v671 = vmul.f32 %v620, %v666
    %v672 = vmul.f32 %v620, %v667
    %v673 = vmul.f32 %v621, %v668
    %v674 = vmul.f32 %v621, %v669
    %v676 = vperm.slane %v670, 0
    %v677 = vperm.slane %v670, 1
    %v680 = vsub.f32 %v676, %v671
    %v681 = vsub.f32 %v677, %v672
    %v682 = vsub.f32 %v676, %v673
    %v683 = vsub.f32 %v677, %v674
    %v684 = vmul.f32 %v603, %v666
    %v685 = vmul.f32 %v604, %v667
    %v686 = vmul.f32 %v605, %v668
    %v687 = vmul.f32 %v606, %v669
    %v688 = vadd.f32 %v684, %v680
    %v689 = vadd.f32 %v685, %v681
    %v690 = vadd.f32 %v686, %v682
    %v691 = vadd.f32 %v687, %v683
    %692 = vst [vmem:[#allocation10] sm:$0xff] %v688
    %693 = vst [vmem:[#allocation10 + $0x8] sm:$0xff] %v689
    %694 = vst [vmem:[#allocation10 + $0x10] sm:$0xff] %v690
    %695 = vst [vmem:[#allocation10 + $0x18] sm:$0xff] %v691
    // Predicated region
    $region42: #{tpu_custom_call.1} parent=1 // pred_check
      _
    $region43: #{tpu_custom_call.1} parent=1 // pred_check_branch
      %697 = sbr.rel (0) target = $region45
    $region44: #{tpu_custom_call.1} parent=1 // pred_region
      %699 = vsyncadd [#allocation4], 0
      %s700 = sshll.u32 [#allocation10], 4
      %s701 = int_to_ptr.vmem [resolvable:$true] %s700
      %s702 = sshll.u32 %s6, 4
      %s703 = int_to_ptr.hbm [resolvable:$true] %s702
      %708 = dma.vmem_to_hbm [thread:$0]  %s701, 512, %s703, [#allocation4], 256, 256, 16
    $region45: #{tpu_custom_call.1} parent=1 // pred_fallthru
      _
    // Predicated region
    $region46: #{tpu_custom_call.1} parent=1 // pred_check
      _
    $region47: #{tpu_custom_call.1} parent=1 // pred_check_branch
      %710 = sbr.rel (0) target = $region49
    $region48: #{tpu_custom_call.1} parent=1 // pred_region
      %712 = dma.done [#allocation4], 512
    $region49: #{tpu_custom_call.1} parent=1 // pred_fallthru
      _
    %713 = vsyncpa [#allocation3], 1
    %714 = vsyncpa [#allocation6], 1
    %715 = vsyncpa [#allocation9], 1
    %716 = vsyncpa [#allocation4], 1

</llo_original>
